<compile_context>
chip_gen: v7x
topology: tpu7x:2x2x1
jax: 0.10.0
libtpu: 0.0.40
codegen_flags: <defaults>
</compile_context>

<pallas_src>
import functools

import jax
import jax.numpy as jnp
from jax import lax
from jax.experimental import pallas as pl
from jax.experimental.pallas import tpu as pltpu


def _round_up(v, m):
    return -(-v // m) * m


def double_conv_kernel(maskl_ref, maskr_ref, x_ref, xt_ref, xb_ref,
                       w1_ref, b1_ref, w2_ref, b2_ref, o_ref,
                       pad_ref, *col_scratch,
                       width, istart, use_im2col):
    """One (image, row-band) per grid step, channels-first (C, band_HW) layout.

    maskl/maskr: (1, band_HW) f32  column-validity masks (hoisted to wrapper)
    x_ref  : (1, Cin, band_HW)     input band, lane dim = band_rows * W
    xt_ref : (1, Cin, >=W)         lane block whose LAST W lanes are the input
                                   row just above the band (clamped at j == 0)
    xb_ref : (1, Cin, >=W)         lane block whose FIRST W lanes are the input
                                   row just below the band (clamped at j == last)
    w1_ref : (MID_P, Cin)          folded 1x1 conv weight (MID padded to 16)
    b1_ref : (MID_P, 1) f32        folded 1x1 conv bias
    w2_ref : (OUT, 9*MID_P)        folded 3x3 weight, col = (dy*3+dx)*MID_P + m
    b2_ref : (OUT, 1) f32          folded 3x3 conv bias
    o_ref  : (1, OUT, band_HW)
    pad_ref: (MID_P, pad_cols)     flat padded intermediate:
             [zeros | top-halo row | band interior | bottom-halo row | zeros]
             interior starts at lane-aligned column `istart`.
    col_scratch: optionally one (9*MID_P, band_HW) im2col buffer (small MID).
    """
    cdt = pad_ref.dtype
    mid_p = w1_ref.shape[0]
    out_c = o_ref.shape[1]
    band_hw = x_ref.shape[2]
    w = width
    j = pl.program_id(1)
    nb = pl.num_programs(1)
    pad_cols = pad_ref.shape[1]
    bot_start = istart + band_hw          # bottom-halo row start
    right_start = bot_start + w           # start of right zero region

    # ---- zero the margins (reads beyond the halo rows are always masked,
    #      but the data must be finite; two cheap narrow stores) ----
    pad_ref[:, :istart - w] = jnp.zeros((mid_p, istart - w), cdt)
    pad_ref[:, right_start:] = jnp.zeros((mid_p, pad_cols - right_start), cdt)

    # ---- 1x1 conv + folded BN + ReLU on the band (lane-aligned store) ----
    h1 = jnp.dot(w1_ref[...], x_ref[0], preferred_element_type=jnp.float32)
    h1 = jnp.maximum(h1 + b1_ref[...], 0.0)                # (MID_P, band_HW)
    pad_ref[:, istart:bot_start] = h1.astype(cdt)

    # ---- halo rows: recompute the 1x1 conv for the rows just above/below
    #      the band (real data at interior band boundaries, zeros only at the
    #      true image border) ----
    hbw = xt_ref.shape[2]
    xt = xt_ref[0, :, hbw - w:hbw]                         # (Cin, W)
    xb = xb_ref[0, :, :w]                                  # (Cin, W)
    valid_t = (j > 0).astype(jnp.float32)
    valid_b = (j < nb - 1).astype(jnp.float32)
    ht = jnp.maximum(
        jnp.dot(w1_ref[...], xt, preferred_element_type=jnp.float32)
        + b1_ref[...], 0.0) * valid_t
    hb = jnp.maximum(
        jnp.dot(w1_ref[...], xb, preferred_element_type=jnp.float32)
        + b1_ref[...], 0.0) * valid_b
    pad_ref[:, istart - w:istart] = ht.astype(cdt)
    pad_ref[:, bot_start:right_start] = hb.astype(cdt)

    # ---- 3x3 conv (SAME) + folded BN + ReLU ----
    ml = maskl_ref[...].astype(cdt)                        # (1, band_HW)
    mr = maskr_ref[...].astype(cdt)

    def tap(dy, dx):
        s = istart + (dy - 1) * w + (dx - 1)
        t = pad_ref[:, s:s + band_hw]                      # (MID_P, band_HW)
        if dx == 0:
            t = t * ml          # kill row-wrapped column (source col -1)
        elif dx == 2:
            t = t * mr          # kill row-wrapped column (source col W)
        return t

    if use_im2col:
        # small-MID path: one (OUT, 9*MID_P) @ (9*MID_P, band_HW) matmul
        col_ref, = col_scratch
        for dy in range(3):
            for dx in range(3):
                r0 = (dy * 3 + dx) * mid_p
                col_ref[r0:r0 + mid_p, :] = tap(dy, dx)
        y = jnp.dot(w2_ref[...], col_ref[...],
                    preferred_element_type=jnp.float32)
    else:
        # large-MID path: 9 accumulating matmuls, no materialized im2col
        y = jnp.zeros((out_c, band_hw), jnp.float32)
        for dy in range(3):
            for dx in range(3):
                t = dy * 3 + dx
                y = y + jnp.dot(w2_ref[:, t * mid_p:(t + 1) * mid_p],
                                tap(dy, dx),
                                preferred_element_type=jnp.float32)

    y = jnp.maximum(y + b2_ref[...], 0.0)                  # (OUT, band_HW)
    o_ref[0] = y.astype(o_ref.dtype)


def _pad_cols(band_rows, w):
    istart = _round_up(w + 1, 128)
    return _round_up(istart + band_rows * w + w + 1, 128)


def _vmem_bytes(band_rows, w, cin, mid_p, out_c, esz, use_im2col):
    bhw = band_rows * w
    total = 2 * cin * bhw * esz                  # x band block (double-buffered)
    total += 2 * 2 * cin * 128 * esz             # halo blocks (double-buffered)
    total += 2 * out_c * bhw * 4                 # output block (f32)
    total += mid_p * _pad_cols(band_rows, w) * esz   # padded intermediate
    if use_im2col:
        total += 9 * mid_p * bhw * esz           # im2col scratch
    total += (mid_p * cin + out_c * 9 * mid_p) * esz  # resident weights
    total += 2 * 2 * bhw * 4                     # masks
    return total


def _choose_band_rows(h, w, cin, mid_p, out_c, esz, use_im2col,
                      budget_bytes=40 * 1024 * 1024):
    """Largest legal row band whose VMEM footprint fits a v7x-safe budget."""
    cands = [h]                                  # single band is always legal
    if w <= 128:
        cands += [br for br in range(8, h, 8)
                  if h % br == 0 and (br * w) % 128 == 0]
    cands = sorted(set(cands))
    best = cands[0]
    for br in cands:
        if _vmem_bytes(br, w, cin, mid_p, out_c, esz, use_im2col) <= budget_bytes:
            best = br
    return best


@functools.partial(jax.jit, static_argnames=("matmul_dtype", "band_rows",
                                              "vmem_limit_bytes"))
def double_conv_pallas(x_nchw, w1, b1, w2, b2, *, matmul_dtype=jnp.float32,
                       band_rows=None, vmem_limit_bytes=48 * 1024 * 1024):
    """x_nchw: (N, Cin, H, W) f32.  w1: (MID, Cin).  b1: (MID,).
    w2: (OUT, MID, 3, 3) OIHW.  b2: (OUT,).  Returns (N, OUT, H, W) f32.
    BN must already be folded into (w1, b1, w2, b2) (inference semantics)."""
    n, cin, h, w = x_nchw.shape
    mid = w1.shape[0]
    out_c = w2.shape[0]
    hw = h * w
    cdt = matmul_dtype
    esz = jnp.dtype(cdt).itemsize

    mid_p = _round_up(mid, 16)           # sublane-aligned MID (f32 and bf16)
    use_im2col = mid_p < 64              # col-free 9-matmul path for big MID

    if band_rows is None:
        band_rows = _choose_band_rows(h, w, cin, mid_p, out_c, esz, use_im2col)
    assert h % band_rows == 0, "band_rows must divide H"
    num_bands = h // band_rows
    band_hw = band_rows * w
    if num_bands > 1:
        assert band_hw % 128 == 0 and w <= 128, (
            "multi-band tiling needs band_rows*W % 128 == 0 and W <= 128")

    istart = _round_up(w + 1, 128)       # lane-aligned interior start
    pad_cols = _pad_cols(band_rows, w)

    # ---- fold / pad parameters into the kernel layouts (no NCHW transpose) --
    x3 = x_nchw.reshape(n, cin, hw).astype(cdt)
    w1_p = jnp.zeros((mid_p, cin), cdt).at[:mid, :].set(w1.astype(cdt))
    b1_p = jnp.zeros((mid_p, 1), jnp.float32).at[:mid, 0].set(
        b1.astype(jnp.float32))
    # (OUT, MID, 3, 3) -> (OUT, 3, 3, MID_P) -> (OUT, 9*MID_P)
    w2_t = jnp.transpose(w2, (0, 2, 3, 1))
    w2_t = jnp.pad(w2_t, ((0, 0), (0, 0), (0, 0), (0, mid_p - mid)))
    w2_f = w2_t.reshape(out_c, 9 * mid_p).astype(cdt)
    b2_c = b2.reshape(out_c, 1).astype(jnp.float32)

    # column-validity masks, hoisted out of the kernel (same for every band)
    wpos = jnp.arange(band_hw, dtype=jnp.int32) % w
    mask_l = (wpos >= 1).astype(jnp.float32).reshape(1, band_hw)
    mask_r = (wpos <= w - 2).astype(jnp.float32).reshape(1, band_hw)

    # halo blocks: 128-lane windows of x3 that hold the row above/below a band
    if num_bands > 1:
        bpl = band_hw // 128             # 128-lane blocks per band
        nlb = hw // 128
        halo_blk = 128
        xt_map = lambda i, j: (i, 0, jnp.maximum(j * bpl - 1, 0))
        xb_map = lambda i, j: (i, 0, jnp.minimum((j + 1) * bpl, nlb - 1))
    else:                                # single band: halos are zeroed anyway
        halo_blk = band_hw
        xt_map = lambda i, j: (i, 0, 0)
        xb_map = lambda i, j: (i, 0, 0)

    scratch = [pltpu.VMEM((mid_p, pad_cols), cdt)]
    if use_im2col:
        scratch.append(pltpu.VMEM((9 * mid_p, band_hw), cdt))

    kernel = functools.partial(double_conv_kernel, width=w, istart=istart,
                               use_im2col=use_im2col)

    y = pl.pallas_call(
        kernel,
        out_shape=jax.ShapeDtypeStruct((n, out_c, hw), jnp.float32),
        grid_spec=pltpu.PrefetchScalarGridSpec(
            num_scalar_prefetch=0,
            grid=(n, num_bands),
            in_specs=[
                pl.BlockSpec((1, band_hw), lambda i, j: (0, 0)),      # mask_l
                pl.BlockSpec((1, band_hw), lambda i, j: (0, 0)),      # mask_r
                pl.BlockSpec((1, cin, band_hw), lambda i, j: (i, 0, j)),
                pl.BlockSpec((1, cin, halo_blk), xt_map),             # top halo
                pl.BlockSpec((1, cin, halo_blk), xb_map),             # bot halo
                pl.BlockSpec((mid_p, cin), lambda i, j: (0, 0)),
                pl.BlockSpec((mid_p, 1), lambda i, j: (0, 0)),
                pl.BlockSpec((out_c, 9 * mid_p), lambda i, j: (0, 0)),
                pl.BlockSpec((out_c, 1), lambda i, j: (0, 0)),
            ],
            out_specs=pl.BlockSpec((1, out_c, band_hw),
                                   lambda i, j: (i, 0, j)),
            scratch_shapes=scratch,
        ),
        compiler_params=pltpu.CompilerParams(
            dimension_semantics=("parallel", "parallel"),
            vmem_limit_bytes=vmem_limit_bytes),
    )(mask_l, mask_r, x3, x3, x3, w1_p, b1_p, w2_f, b2_c)
    return y.reshape(n, out_c, h, w)


def fold_bn(w, b, gamma, beta, mean, var, eps=1e-5):
    """Fold inference-mode BatchNorm into a conv whose out-channel is axis 0."""
    scale = gamma / jnp.sqrt(var + eps)
    w_f = w * scale.reshape((-1,) + (1,) * (w.ndim - 1))
    b_f = (b - mean) * scale + beta
    return w_f, b_f


def reference_forward(x_nchw, w1, b1, w2, b2):
    """Pure-JAX reference with the same folded parameters (NCHW convs)."""
    h = jnp.einsum('nchw,mc->nmhw', x_nchw, w1) + b1[None, :, None, None]
    h = jnp.maximum(h, 0.0)
    y = lax.conv_general_dilated(
        h, w2, window_strides=(1, 1), padding='SAME',
        dimension_numbers=('NCHW', 'OIHW', 'NCHW')) + b2[None, :, None, None]
    return jnp.maximum(y, 0.0)


if __name__ == "__main__":
    def run_case(key, in_ch, mid_ch, out_ch, n, h, w, band_rows,
                 matmul_dtype, rtol, atol):
        cin = in_ch + mid_ch
        ks = jax.random.split(key, 13)
        x = jax.random.normal(ks[0], (n, cin, h, w), dtype=jnp.float32)

        w1_raw = jax.random.normal(ks[1], (mid_ch, cin), jnp.float32) * 0.2
        b1_raw = jax.random.normal(ks[2], (mid_ch,), jnp.float32) * 0.1
        g1 = 1.0 + 0.1 * jax.random.normal(ks[3], (mid_ch,), jnp.float32)
        be1 = 0.1 * jax.random.normal(ks[4], (mid_ch,), jnp.float32)
        m1 = 0.1 * jax.random.normal(ks[5], (mid_ch,), jnp.float32)
        v1 = jnp.abs(jax.random.normal(ks[6], (mid_ch,), jnp.float32)) + 0.5

        w2_raw = jax.random.normal(ks[7], (out_ch, mid_ch, 3, 3),
                                   jnp.float32) * 0.2
        b2_raw = jax.random.normal(ks[8], (out_ch,), jnp.float32) * 0.1
        g2 = 1.0 + 0.1 * jax.random.normal(ks[9], (out_ch,), jnp.float32)
        be2 = 0.1 * jax.random.normal(ks[10], (out_ch,), jnp.float32)
        m2 = 0.1 * jax.random.normal(ks[11], (out_ch,), jnp.float32)
        v2 = jnp.abs(jax.random.normal(ks[12], (out_ch,), jnp.float32)) + 0.5

        w1f, b1f = fold_bn(w1_raw, b1_raw, g1, be1, m1, v1)
        w2f, b2f = fold_bn(w2_raw, b2_raw, g2, be2, m2, v2)

        out = jax.block_until_ready(double_conv_pallas(
            x, w1f, b1f, w2f, b2f, matmul_dtype=matmul_dtype,
            band_rows=band_rows))
        ref = jax.block_until_ready(reference_forward(x, w1f, b1f, w2f, b2f))
        assert out.shape == (n, out_ch, h, w), out.shape
        err = float(jnp.max(jnp.abs(out - ref)))
        assert jnp.allclose(out, ref, rtol=rtol, atol=atol), err

    key = jax.random.PRNGKey(0)
    k1, k2 = jax.random.split(key)

    # Small CRAFT head config (module double_conv(4, 4, 8)): im2col path,
    # 2 row bands per image (exercises the interior halo recompute).
    run_case(k1, 4, 4, 8, 2, 16, 16, 8, jnp.float32, 1e-4, 1e-4)

    # Larger-channel config: direct (col-free) 9-matmul path + row bands.
    run_case(k2, 32, 64, 64, 1, 32, 32, 16, jnp.float32, 1e-3, 1e-3)

    # bf16 matmul operands (v6e/v7x MXU path), relaxed tolerance.
    run_case(k2, 32, 64, 64, 1, 32, 32, 16, jnp.bfloat16, 5e-2, 3e-1)

    print("KERNEL_OK")
</pallas_src>

<mosaic_0001>
module attributes {stable_mosaic.version = 11 : i64} {
  func.func @double_conv_kernel(%arg0: i32, %arg1: i32, %arg2: memref<1x128xf32, #tpu.memory_space<vmem>>, %arg3: memref<1x128xf32, #tpu.memory_space<vmem>>, %arg4: memref<1x8x128xf32, #tpu.memory_space<vmem>>, %arg5: memref<1x8x128xf32, #tpu.memory_space<vmem>>, %arg6: memref<1x8x128xf32, #tpu.memory_space<vmem>>, %arg7: memref<16x8xf32, #tpu.memory_space<vmem>>, %arg8: memref<16x1xf32, #tpu.memory_space<vmem>>, %arg9: memref<8x144xf32, #tpu.memory_space<vmem>>, %arg10: memref<8x1xf32, #tpu.memory_space<vmem>>, %arg11: memref<1x8x128xf32, #tpu.memory_space<vmem>>, %arg12: memref<16x384xf32, #tpu.memory_space<vmem>>, %arg13: memref<144x128xf32, #tpu.memory_space<vmem>>) attributes {dimension_semantics = [#tpu.dimension_semantics<parallel>, #tpu.dimension_semantics<parallel>], iteration_bounds = array<i64: 2, 2>, scalar_prefetch = 0 : i64, scratch_operands = 2 : i64, tpu.core_type = #tpu.core_type<tc>, window_params = [{pipeline_mode = #tpu.pipeline_mode<synchronous>, transform_indices = @transform_0, window_bounds = array<i64: 1, 128>}, {pipeline_mode = #tpu.pipeline_mode<synchronous>, transform_indices = @transform_1, window_bounds = array<i64: 1, 128>}, {transform_indices = @transform_2, window_bounds = array<i64: 1, 8, 128>}, {transform_indices = @transform_3, window_bounds = array<i64: 1, 8, 128>}, {transform_indices = @transform_4, window_bounds = array<i64: 1, 8, 128>}, {pipeline_mode = #tpu.pipeline_mode<synchronous>, transform_indices = @transform_5, window_bounds = array<i64: 16, 8>}, {pipeline_mode = #tpu.pipeline_mode<synchronous>, transform_indices = @transform_6, window_bounds = array<i64: 16, 1>}, {pipeline_mode = #tpu.pipeline_mode<synchronous>, transform_indices = @transform_7, window_bounds = array<i64: 8, 144>}, {pipeline_mode = #tpu.pipeline_mode<synchronous>, transform_indices = @transform_8, window_bounds = array<i64: 8, 1>}, {transform_indices = @transform_9, window_bounds = array<i64: 1, 8, 128>}]} {
    %cst = arith.constant 0.000000e+00 : f32
    %0 = vector.broadcast %cst : f32 to vector<16x112xf32>
    %c0 = arith.constant 0 : index
    %c0_0 = arith.constant 0 : index
    %1 = vector.load %arg12[%c0, %c0_0] : memref<16x384xf32, #tpu.memory_space<vmem>>, vector<16x112xf32>
    tpu.vector_store %arg12[%c0, %c0_0], %0 {strides = array<i32>} : memref<16x384xf32, #tpu.memory_space<vmem>>, vector<16x112xf32>,
    %cst_1 = arith.constant 0.000000e+00 : f32
    %2 = vector.broadcast %cst_1 : f32 to vector<16x112xf32>
    %c0_2 = arith.constant 0 : index
    %c272 = arith.constant 272 : index
    %3 = vector.load %arg12[%c0_2, %c272] : memref<16x384xf32, #tpu.memory_space<vmem>>, vector<16x112xf32>
    tpu.vector_store %arg12[%c0_2, %c272], %2 {strides = array<i32>} : memref<16x384xf32, #tpu.memory_space<vmem>>, vector<16x112xf32>,
    %c0_3 = arith.constant 0 : index
    %c0_4 = arith.constant 0 : index
    %4 = vector.load %arg7[%c0_3, %c0_4] : memref<16x8xf32, #tpu.memory_space<vmem>>, vector<16x8xf32>
    %c0_5 = arith.constant 0 : index
    %c0_6 = arith.constant 0 : index
    %c0_7 = arith.constant 0 : index
    %5 = vector.load %arg4[%c0_5, %c0_6, %c0_7] : memref<1x8x128xf32, #tpu.memory_space<vmem>>, vector<1x8x128xf32>
    %6 = vector.shape_cast %5 : vector<1x8x128xf32> to vector<8x128xf32>
    %cst_8 = arith.constant dense<0.000000e+00> : vector<16x128xf32>
    %7 = tpu.matmul %4, %6, %cst_8 {dimension_numbers = #tpu.dot_dimension_numbers<[1], [0], [0], [1], [0, 0, 1, 1], [], []>} : vector<16x8xf32>, vector<8x128xf32>, vector<16x128xf32> -> vector<16x128xf32>
    %c0_9 = arith.constant 0 : index
    %c0_10 = arith.constant 0 : index
    %8 = vector.load %arg8[%c0_9, %c0_10] : memref<16x1xf32, #tpu.memory_space<vmem>>, vector<16x1xf32>
    %9 = vector.broadcast %8 : vector<16x1xf32> to vector<16x128xf32>
    %10 = arith.addf %7, %9 : vector<16x128xf32>
    %cst_11 = arith.constant 0.000000e+00 : f32
    %11 = vector.broadcast %cst_11 : f32 to vector<16x128xf32>
    %12 = arith.maximumf %10, %11 : vector<16x128xf32>
    %c0_12 = arith.constant 0 : index
    %c128 = arith.constant 128 : index
    %13 = vector.load %arg12[%c0_12, %c128] : memref<16x384xf32, #tpu.memory_space<vmem>>, vector<16x128xf32>
    tpu.vector_store %arg12[%c0_12, %c128], %12 {strides = array<i32>} : memref<16x384xf32, #tpu.memory_space<vmem>>, vector<16x128xf32>,
    %c0_13 = arith.constant 0 : index
    %c0_14 = arith.constant 0 : index
    %c112 = arith.constant 112 : index
    %14 = vector.load %arg5[%c0_13, %c0_14, %c112] : memref<1x8x128xf32, #tpu.memory_space<vmem>>, vector<1x8x16xf32>
    %15 = vector.shape_cast %14 : vector<1x8x16xf32> to vector<8x16xf32>
    %c0_15 = arith.constant 0 : index
    %c0_16 = arith.constant 0 : index
    %c0_17 = arith.constant 0 : index
    %16 = vector.load %arg6[%c0_15, %c0_16, %c0_17] : memref<1x8x128xf32, #tpu.memory_space<vmem>>, vector<1x8x16xf32>
    %17 = vector.shape_cast %16 : vector<1x8x16xf32> to vector<8x16xf32>
    %c0_i32 = arith.constant 0 : i32
    %18 = arith.cmpi sgt, %arg1, %c0_i32 : i32
    %19 = arith.extui %18 : i1 to i32
    %20 = arith.sitofp %19 : i32 to f32
    %c1_i32 = arith.constant 1 : i32
    %21 = arith.cmpi slt, %arg1, %c1_i32 : i32
    %22 = arith.extui %21 : i1 to i32
    %23 = arith.sitofp %22 : i32 to f32
    %c0_18 = arith.constant 0 : index
    %c0_19 = arith.constant 0 : index
    %24 = vector.load %arg7[%c0_18, %c0_19] : memref<16x8xf32, #tpu.memory_space<vmem>>, vector<16x8xf32>
    %cst_20 = arith.constant dense<0.000000e+00> : vector<16x16xf32>
    %25 = tpu.matmul %24, %15, %cst_20 {dimension_numbers = #tpu.dot_dimension_numbers<[1], [0], [0], [1], [0, 0, 1, 1], [], []>} : vector<16x8xf32>, vector<8x16xf32>, vector<16x16xf32> -> vector<16x16xf32>
    %c0_21 = arith.constant 0 : index
    %c0_22 = arith.constant 0 : index
    %26 = vector.load %arg8[%c0_21, %c0_22] : memref<16x1xf32, #tpu.memory_space<vmem>>, vector<16x1xf32>
    %27 = vector.broadcast %26 : vector<16x1xf32> to vector<16x16xf32>
    %28 = arith.addf %25, %27 : vector<16x16xf32>
    %cst_23 = arith.constant 0.000000e+00 : f32
    %29 = vector.broadcast %cst_23 : f32 to vector<16x16xf32>
    %30 = arith.maximumf %28, %29 : vector<16x16xf32>
    %31 = vector.broadcast %20 : f32 to vector<16x16xf32>
    %32 = arith.mulf %30, %31 : vector<16x16xf32>
    %c0_24 = arith.constant 0 : index
    %c0_25 = arith.constant 0 : index
    %33 = vector.load %arg7[%c0_24, %c0_25] : memref<16x8xf32, #tpu.memory_space<vmem>>, vector<16x8xf32>
    %cst_26 = arith.constant dense<0.000000e+00> : vector<16x16xf32>
    %34 = tpu.matmul %33, %17, %cst_26 {dimension_numbers = #tpu.dot_dimension_numbers<[1], [0], [0], [1], [0, 0, 1, 1], [], []>} : vector<16x8xf32>, vector<8x16xf32>, vector<16x16xf32> -> vector<16x16xf32>
    %c0_27 = arith.constant 0 : index
    %c0_28 = arith.constant 0 : index
    %35 = vector.load %arg8[%c0_27, %c0_28] : memref<16x1xf32, #tpu.memory_space<vmem>>, vector<16x1xf32>
    %36 = vector.broadcast %35 : vector<16x1xf32> to vector<16x16xf32>
    %37 = arith.addf %34, %36 : vector<16x16xf32>
    %cst_29 = arith.constant 0.000000e+00 : f32
    %38 = vector.broadcast %cst_29 : f32 to vector<16x16xf32>
    %39 = arith.maximumf %37, %38 : vector<16x16xf32>
    %40 = vector.broadcast %23 : f32 to vector<16x16xf32>
    %41 = arith.mulf %39, %40 : vector<16x16xf32>
    %c0_30 = arith.constant 0 : index
    %c112_31 = arith.constant 112 : index
    %42 = vector.load %arg12[%c0_30, %c112_31] : memref<16x384xf32, #tpu.memory_space<vmem>>, vector<16x16xf32>
    tpu.vector_store %arg12[%c0_30, %c112_31], %32 {strides = array<i32>} : memref<16x384xf32, #tpu.memory_space<vmem>>, vector<16x16xf32>,
    %c0_32 = arith.constant 0 : index
    %c256 = arith.constant 256 : index
    %43 = vector.load %arg12[%c0_32, %c256] : memref<16x384xf32, #tpu.memory_space<vmem>>, vector<16x16xf32>
    tpu.vector_store %arg12[%c0_32, %c256], %41 {strides = array<i32>} : memref<16x384xf32, #tpu.memory_space<vmem>>, vector<16x16xf32>,
    %c0_33 = arith.constant 0 : index
    %c0_34 = arith.constant 0 : index
    %44 = vector.load %arg2[%c0_33, %c0_34] : memref<1x128xf32, #tpu.memory_space<vmem>>, vector<1x128xf32>
    %c0_35 = arith.constant 0 : index
    %c0_36 = arith.constant 0 : index
    %45 = vector.load %arg3[%c0_35, %c0_36] : memref<1x128xf32, #tpu.memory_space<vmem>>, vector<1x128xf32>
    %c0_37 = arith.constant 0 : index
    %c111 = arith.constant 111 : index
    %46 = vector.load %arg12[%c0_37, %c111] : memref<16x384xf32, #tpu.memory_space<vmem>>, vector<16x128xf32>
    %47 = vector.broadcast %44 : vector<1x128xf32> to vector<16x128xf32>
    %48 = arith.mulf %46, %47 : vector<16x128xf32>
    %c0_38 = arith.constant 0 : index
    %c0_39 = arith.constant 0 : index
    %49 = vector.load %arg13[%c0_38, %c0_39] : memref<144x128xf32, #tpu.memory_space<vmem>>, vector<16x128xf32>
    tpu.vector_store %arg13[%c0_38, %c0_39], %48 {strides = array<i32>} : memref<144x128xf32, #tpu.memory_space<vmem>>, vector<16x128xf32>,
    %c0_40 = arith.constant 0 : index
    %c112_41 = arith.constant 112 : index
    %50 = vector.load %arg12[%c0_40, %c112_41] : memref<16x384xf32, #tpu.memory_space<vmem>>, vector<16x128xf32>
    %c16 = arith.constant 16 : index
    %c0_42 = arith.constant 0 : index
    %51 = vector.load %arg13[%c16, %c0_42] : memref<144x128xf32, #tpu.memory_space<vmem>>, vector<16x128xf32>
    tpu.vector_store %arg13[%c16, %c0_42], %50 {strides = array<i32>} : memref<144x128xf32, #tpu.memory_space<vmem>>, vector<16x128xf32>,
    %c0_43 = arith.constant 0 : index
    %c113 = arith.constant 113 : index
    %52 = vector.load %arg12[%c0_43, %c113] : memref<16x384xf32, #tpu.memory_space<vmem>>, vector<16x128xf32>
    %53 = vector.broadcast %45 : vector<1x128xf32> to vector<16x128xf32>
    %54 = arith.mulf %52, %53 : vector<16x128xf32>
    %c32 = arith.constant 32 : index
    %c0_44 = arith.constant 0 : index
    %55 = vector.load %arg13[%c32, %c0_44] : memref<144x128xf32, #tpu.memory_space<vmem>>, vector<16x128xf32>
    tpu.vector_store %arg13[%c32, %c0_44], %54 {strides = array<i32>} : memref<144x128xf32, #tpu.memory_space<vmem>>, vector<16x128xf32>,
    %c0_45 = arith.constant 0 : index
    %c127 = arith.constant 127 : index
    %56 = vector.load %arg12[%c0_45, %c127] : memref<16x384xf32, #tpu.memory_space<vmem>>, vector<16x128xf32>
    %57 = vector.broadcast %44 : vector<1x128xf32> to vector<16x128xf32>
    %58 = arith.mulf %56, %57 : vector<16x128xf32>
    %c48 = arith.constant 48 : index
    %c0_46 = arith.constant 0 : index
    %59 = vector.load %arg13[%c48, %c0_46] : memref<144x128xf32, #tpu.memory_space<vmem>>, vector<16x128xf32>
    tpu.vector_store %arg13[%c48, %c0_46], %58 {strides = array<i32>} : memref<144x128xf32, #tpu.memory_space<vmem>>, vector<16x128xf32>,
    %c0_47 = arith.constant 0 : index
    %c128_48 = arith.constant 128 : index
    %60 = vector.load %arg12[%c0_47, %c128_48] : memref<16x384xf32, #tpu.memory_space<vmem>>, vector<16x128xf32>
    %c64 = arith.constant 64 : index
    %c0_49 = arith.constant 0 : index
    %61 = vector.load %arg13[%c64, %c0_49] : memref<144x128xf32, #tpu.memory_space<vmem>>, vector<16x128xf32>
    tpu.vector_store %arg13[%c64, %c0_49], %60 {strides = array<i32>} : memref<144x128xf32, #tpu.memory_space<vmem>>, vector<16x128xf32>,
    %c0_50 = arith.constant 0 : index
    %c129 = arith.constant 129 : index
    %62 = vector.load %arg12[%c0_50, %c129] : memref<16x384xf32, #tpu.memory_space<vmem>>, vector<16x128xf32>
    %63 = vector.broadcast %45 : vector<1x128xf32> to vector<16x128xf32>
    %64 = arith.mulf %62, %63 : vector<16x128xf32>
    %c80 = arith.constant 80 : index
    %c0_51 = arith.constant 0 : index
    %65 = vector.load %arg13[%c80, %c0_51] : memref<144x128xf32, #tpu.memory_space<vmem>>, vector<16x128xf32>
    tpu.vector_store %arg13[%c80, %c0_51], %64 {strides = array<i32>} : memref<144x128xf32, #tpu.memory_space<vmem>>, vector<16x128xf32>,
    %c0_52 = arith.constant 0 : index
    %c143 = arith.constant 143 : index
    %66 = vector.load %arg12[%c0_52, %c143] : memref<16x384xf32, #tpu.memory_space<vmem>>, vector<16x128xf32>
    %67 = vector.broadcast %44 : vector<1x128xf32> to vector<16x128xf32>
    %68 = arith.mulf %66, %67 : vector<16x128xf32>
    %c96 = arith.constant 96 : index
    %c0_53 = arith.constant 0 : index
    %69 = vector.load %arg13[%c96, %c0_53] : memref<144x128xf32, #tpu.memory_space<vmem>>, vector<16x128xf32>
    tpu.vector_store %arg13[%c96, %c0_53], %68 {strides = array<i32>} : memref<144x128xf32, #tpu.memory_space<vmem>>, vector<16x128xf32>,
    %c0_54 = arith.constant 0 : index
    %c144 = arith.constant 144 : index
    %70 = vector.load %arg12[%c0_54, %c144] : memref<16x384xf32, #tpu.memory_space<vmem>>, vector<16x128xf32>
    %c112_55 = arith.constant 112 : index
    %c0_56 = arith.constant 0 : index
    %71 = vector.load %arg13[%c112_55, %c0_56] : memref<144x128xf32, #tpu.memory_space<vmem>>, vector<16x128xf32>
    tpu.vector_store %arg13[%c112_55, %c0_56], %70 {strides = array<i32>} : memref<144x128xf32, #tpu.memory_space<vmem>>, vector<16x128xf32>,
    %c0_57 = arith.constant 0 : index
    %c145 = arith.constant 145 : index
    %72 = vector.load %arg12[%c0_57, %c145] : memref<16x384xf32, #tpu.memory_space<vmem>>, vector<16x128xf32>
    %73 = vector.broadcast %45 : vector<1x128xf32> to vector<16x128xf32>
    %74 = arith.mulf %72, %73 : vector<16x128xf32>
    %c128_58 = arith.constant 128 : index
    %c0_59 = arith.constant 0 : index
    %75 = vector.load %arg13[%c128_58, %c0_59] : memref<144x128xf32, #tpu.memory_space<vmem>>, vector<16x128xf32>
    tpu.vector_store %arg13[%c128_58, %c0_59], %74 {strides = array<i32>} : memref<144x128xf32, #tpu.memory_space<vmem>>, vector<16x128xf32>,
    %c0_60 = arith.constant 0 : index
    %c0_61 = arith.constant 0 : index
    %76 = vector.load %arg9[%c0_60, %c0_61] : memref<8x144xf32, #tpu.memory_space<vmem>>, vector<8x144xf32>
    %c0_62 = arith.constant 0 : index
    %c0_63 = arith.constant 0 : index
    %77 = vector.load %arg13[%c0_62, %c0_63] : memref<144x128xf32, #tpu.memory_space<vmem>>, vector<144x128xf32>
    %cst_64 = arith.constant dense<0.000000e+00> : vector<8x128xf32>
    %78 = tpu.matmul %76, %77, %cst_64 {dimension_numbers = #tpu.dot_dimension_numbers<[1], [0], [0], [1], [0, 0, 1, 1], [], []>} : vector<8x144xf32>, vector<144x128xf32>, vector<8x128xf32> -> vector<8x128xf32>
    %c0_65 = arith.constant 0 : index
    %c0_66 = arith.constant 0 : index
    %79 = vector.load %arg10[%c0_65, %c0_66] : memref<8x1xf32, #tpu.memory_space<vmem>>, vector<8x1xf32>
    %80 = vector.broadcast %79 : vector<8x1xf32> to vector<8x128xf32>
    %81 = arith.addf %78, %80 : vector<8x128xf32>
    %cst_67 = arith.constant 0.000000e+00 : f32
    %82 = vector.broadcast %cst_67 : f32 to vector<8x128xf32>
    %83 = arith.maximumf %81, %82 : vector<8x128xf32>
    %c0_68 = arith.constant 0 : index
    %c0_69 = arith.constant 0 : index
    %c0_70 = arith.constant 0 : index
    %84 = vector.load %arg11[%c0_68, %c0_69, %c0_70] : memref<1x8x128xf32, #tpu.memory_space<vmem>>, vector<1x8x128xf32>
    %85 = vector.shape_cast %84 : vector<1x8x128xf32> to vector<8x128xf32>
    %86 = vector.shape_cast %83 : vector<8x128xf32> to vector<1x8x128xf32>
    tpu.vector_store %arg11[%c0_68, %c0_69, %c0_70], %86 {strides = array<i32>} : memref<1x8x128xf32, #tpu.memory_space<vmem>>, vector<1x8x128xf32>,
    return
  }
  func.func @transform_0(%arg0: i32, %arg1: i32) -> (i32, i32) {
    %c0_i32 = arith.constant 0 : i32
    %c0_i32_0 = arith.constant 0 : i32
    %c0_i32_1 = arith.constant 0 : i32
    return %c0_i32, %c0_i32_0 : i32, i32
  }
  func.func @transform_1(%arg0: i32, %arg1: i32) -> (i32, i32) {
    %c0_i32 = arith.constant 0 : i32
    %c0_i32_0 = arith.constant 0 : i32
    %c0_i32_1 = arith.constant 0 : i32
    return %c0_i32, %c0_i32_0 : i32, i32
  }
  func.func @transform_2(%arg0: i32, %arg1: i32) -> (i32, i32, i32) {
    %c0_i32 = arith.constant 0 : i32
    %c0_i32_0 = arith.constant 0 : i32
    return %arg0, %c0_i32, %arg1 : i32, i32, i32
  }
  func.func @transform_3(%arg0: i32, %arg1: i32) -> (i32, i32, i32) {
    %c1_i32 = arith.constant 1 : i32
    %0 = arith.muli %arg1, %c1_i32 : i32
    %c1_i32_0 = arith.constant 1 : i32
    %1 = arith.subi %0, %c1_i32_0 : i32
    %c0_i32 = arith.constant 0 : i32
    %2 = arith.maxsi %1, %c0_i32 : i32
    %c0_i32_1 = arith.constant 0 : i32
    %c0_i32_2 = arith.constant 0 : i32
    return %arg0, %c0_i32_1, %2 : i32, i32, i32
  }
  func.func @transform_4(%arg0: i32, %arg1: i32) -> (i32, i32, i32) {
    %c1_i32 = arith.constant 1 : i32
    %0 = arith.addi %arg1, %c1_i32 : i32
    %c1_i32_0 = arith.constant 1 : i32
    %1 = arith.muli %0, %c1_i32_0 : i32
    %c1_i32_1 = arith.constant 1 : i32
    %2 = arith.minsi %1, %c1_i32_1 : i32
    %c0_i32 = arith.constant 0 : i32
    %c0_i32_2 = arith.constant 0 : i32
    return %arg0, %c0_i32, %2 : i32, i32, i32
  }
  func.func @transform_5(%arg0: i32, %arg1: i32) -> (i32, i32) {
    %c0_i32 = arith.constant 0 : i32
    %c0_i32_0 = arith.constant 0 : i32
    %c0_i32_1 = arith.constant 0 : i32
    return %c0_i32, %c0_i32_0 : i32, i32
  }
  func.func @transform_6(%arg0: i32, %arg1: i32) -> (i32, i32) {
    %c0_i32 = arith.constant 0 : i32
    %c0_i32_0 = arith.constant 0 : i32
    %c0_i32_1 = arith.constant 0 : i32
    return %c0_i32, %c0_i32_0 : i32, i32
  }
  func.func @transform_7(%arg0: i32, %arg1: i32) -> (i32, i32) {
    %c0_i32 = arith.constant 0 : i32
    %c0_i32_0 = arith.constant 0 : i32
    %c0_i32_1 = arith.constant 0 : i32
    return %c0_i32, %c0_i32_0 : i32, i32
  }
  func.func @transform_8(%arg0: i32, %arg1: i32) -> (i32, i32) {
    %c0_i32 = arith.constant 0 : i32
    %c0_i32_0 = arith.constant 0 : i32
    %c0_i32_1 = arith.constant 0 : i32
    return %c0_i32, %c0_i32_0 : i32, i32
  }
  func.func @transform_9(%arg0: i32, %arg1: i32) -> (i32, i32, i32) {
    %c0_i32 = arith.constant 0 : i32
    %c0_i32_0 = arith.constant 0 : i32
    return %arg0, %c0_i32, %arg1 : i32, i32, i32
  }
}

</mosaic_0001>

<llo_original>
// kernel: double_conv_pallas.1
$region0: #{double_conv_pallas.1}
  #allocation0 [shape = 'u32[]', space=smem, size = 0x4, offset = 0x4, fixed_abs, tag = 'smem constant byte address 0x4 - core index']
  #allocation1 [shape = 'u32[144,128]{1,0:T(1,128)}', space=vmem, size = 0x12000, scoped, tag = 'internal scratch']
  #allocation2 [shape = 'f32[16,384]{1,0:T(8,128)}', space=vmem, size = 0x6000, scoped, tag = 'scratch operand']
  #allocation3 [shape = 'f32[144,128]{1,0:T(8,128)}', space=vmem, size = 0x12000, scoped, tag = 'scratch operand']
  %s0 = inlined_call_operand.vmem [shape: f32[1,128], index: 0, kind: input, shape index: {}]
  %s1 = inlined_call_operand.vmem [shape: f32[1,128], index: 1, kind: input, shape index: {}]
  %s2 = inlined_call_operand.vmem [shape: f32[2,8,256], index: 2, kind: input, shape index: {}, may-alias: {2,3,4}]
  %s3 = inlined_call_operand.vmem [shape: f32[2,8,256], index: 3, kind: input, shape index: {}, may-alias: {2,3,4}]
  %s4 = inlined_call_operand.vmem [shape: f32[2,8,256], index: 4, kind: input, shape index: {}, may-alias: {2,3,4}]
  %s5 = inlined_call_operand.vmem [shape: f32[16,8], index: 5, kind: input, shape index: {}]
  %s6 = inlined_call_operand.vmem [shape: f32[16,1], index: 6, kind: input, shape index: {}]
  %s7 = inlined_call_operand.vmem [shape: f32[8,144], index: 7, kind: input, shape index: {}]
  %s8 = inlined_call_operand.vmem [shape: f32[8,1], index: 8, kind: input, shape index: {}]
  %s9 = inlined_call_operand.vmem [shape: f32[2,8,256], index: 9, kind: output, shape index: {}]
  %s10 = sld [smem:[#allocation0]]
  $region69: #{double_conv_pallas.1} parent=0
    _
  %s12 = ssub.s32 1, %s10
  %s13 = scalar_select 0, %s12, %s10
  loop: start=0, step=1, limit=6
  $region2: #{double_conv_pallas.1} parent=0 // loop_pre_header
    _
  $region3: #{double_conv_pallas.1} parent=0 // loop_header
    %s15 = sphi 0, %s19
    %p16 = scmp.ge.s32.totalorder %s15, 6
    %s22 = sphi 0, %s34
    %s23 = sphi 0, %s30
    %s24 = sphi 0, %s22
    %s25 = sphi 0, %s23
    %s26 = sphi 0, %s24
    %s27 = sphi 0, %s25
    %s35 = sphi 0, %s35
    %s37 = sphi 0, %s35
    %s38 = sphi 0, %s37
    %s52 = sphi 0, %s38
    %s56 = sphi 0, %s56
    %s58 = sphi 0, %s56
    %s59 = sphi 0, %s58
    %s73 = sphi 0, %s59
    %s81 = sphi 0, %s83
    %s84 = sphi 0, %s81
    %s85 = sphi 0, %s84
    %s101 = sphi 0, %s85
    %s115 = sphi 0, %s117
    %s118 = sphi 0, %s115
    %s119 = sphi 0, %s118
    %s135 = sphi 0, %s119
    %s149 = sphi 0, %s151
    %s152 = sphi 0, %s149
    %s153 = sphi 0, %s152
    %s169 = sphi 0, %s153
    %s173 = sphi 0, %s173
    %s175 = sphi 0, %s173
    %s176 = sphi 0, %s175
    %s190 = sphi 0, %s176
    %s194 = sphi 0, %s194
    %s196 = sphi 0, %s194
    %s197 = sphi 0, %s196
    %s211 = sphi 0, %s197
    %s215 = sphi 0, %s215
    %s217 = sphi 0, %s215
    %s218 = sphi 0, %s217
    %s232 = sphi 0, %s218
    %s236 = sphi 0, %s236
    %s238 = sphi 0, %s236
    %s239 = sphi 0, %s238
    %s253 = sphi 0, %s239
    %s261 = sphi 0, %s263
    %s264 = sphi 0, %s261
    %s265 = sphi 0, %s264
    %s281 = sphi 0, %s265
  $region4: #{double_conv_pallas.1} parent=0 // loop_header_branch
    %18 = sbr.rel (%p16) target = $region8
  $region5: #{double_conv_pallas.1} parent=0 // loop_body
    %s20 = ssub.s32 %s15, 1
    %s21 = ssub.s32 %s15, 2
    %s28 = sadd.s32 1, %s23
    %p29 = scmp.ge.s32.totalorder %s28, 2
    %s30 = scalar_select %p29, 0, %s28
    %s31 = sadd.s32 1, %s22
    %s32 = scalar_select %p29, %s31, %s22
    %p33 = scmp.ge.s32.totalorder %s32, 2
    %s34 = scalar_select %p33, 0, %s32
    %s36 = sadd.s32 %s35, 1
    %p39 = scmp.eq.s32.totalorder %s15, 3
    %p40 = scmp.ne.s32.totalorder %s35, %s37
    %p41 = scmp.eq.s32.totalorder %s15, 0
    %p42 = por %p40, %p41
    %p43 = scmp.ne.s32.totalorder %s35, %s37
    %p44 = scmp.eq.s32.totalorder %s20, 3
    %p45 = por %p43, %p44
    %p46 = scmp.ne.s32.totalorder %s37, %s38
    %p47 = scmp.eq.s32.totalorder %s20, 0
    %p48 = por %p46, %p47
    %p49 = scmp.ne.s32.totalorder %s37, %s38
    %p50 = scmp.eq.s32.totalorder %s21, 3
    %p51 = por %p49, %p50
    %p53 = scmp.ne.s32.totalorder %s38, %s52
    %p54 = scmp.eq.s32.totalorder %s21, 0
    %p55 = por %p53, %p54
    %s57 = sadd.s32 %s56, 1
    %p60 = scmp.eq.s32.totalorder %s15, 3
    %p61 = scmp.ne.s32.totalorder %s56, %s58
    %p62 = scmp.eq.s32.totalorder %s15, 0
    %p63 = por %p61, %p62
    %p64 = scmp.ne.s32.totalorder %s56, %s58
    %p65 = scmp.eq.s32.totalorder %s20, 3
    %p66 = por %p64, %p65
    %p67 = scmp.ne.s32.totalorder %s58, %s59
    %p68 = scmp.eq.s32.totalorder %s20, 0
    %p69 = por %p67, %p68
    %p70 = scmp.ne.s32.totalorder %s58, %s59
    %p71 = scmp.eq.s32.totalorder %s21, 3
    %p72 = por %p70, %p71
    %p74 = scmp.ne.s32.totalorder %s59, %s73
    %p75 = scmp.eq.s32.totalorder %s21, 0
    %p76 = por %p74, %p75
    %s77 = ssub.s32 %s22, %s34
    %s78 = ssub.s32 %s23, %s30
    %s79 = sor.u32 %s77, %s78
    %p80 = scmp.eq.s32.totalorder %s79, 0
    %s82 = sadd.s32 %s81, 1
    %s83 = scalar_select %p80, %s81, %s82
    %p86 = pneg %p80
    %p87 = scmp.eq.s32.totalorder %s15, 3
    %p88 = por %p86, %p87
    %p89 = scmp.ne.s32.totalorder %s81, %s84
    %p90 = scmp.eq.s32.totalorder %s15, 0
    %p91 = por %p89, %p90
    %p92 = scmp.ne.s32.totalorder %s81, %s84
    %p93 = scmp.eq.s32.totalorder %s20, 3
    %p94 = por %p92, %p93
    %p95 = scmp.ne.s32.totalorder %s84, %s85
    %p96 = scmp.eq.s32.totalorder %s20, 0
    %p97 = por %p95, %p96
    %p98 = scmp.ne.s32.totalorder %s84, %s85
    %p99 = scmp.eq.s32.totalorder %s21, 3
    %p100 = por %p98, %p99
    %p102 = scmp.ne.s32.totalorder %s85, %s101
    %p103 = scmp.eq.s32.totalorder %s21, 0
    %p104 = por %p102, %p103
    %s105 = ssub.s32 %s23, 1
    %p106 = scmp.gt.s32.totalorder %s105, 0
    %s107 = scalar_select %p106, %s105, 0
    %s108 = ssub.s32 %s30, 1
    %p109 = scmp.gt.s32.totalorder %s108, 0
    %s110 = scalar_select %p109, %s108, 0
    %s111 = ssub.s32 %s22, %s34
    %s112 = ssub.s32 %s107, %s110
    %s113 = sor.u32 %s111, %s112
    %p114 = scmp.eq.s32.totalorder %s113, 0
    %s116 = sadd.s32 %s115, 1
    %s117 = scalar_select %p114, %s115, %s116
    %p120 = pneg %p114
    %p121 = scmp.eq.s32.totalorder %s15, 3
    %p122 = por %p120, %p121
    %p123 = scmp.ne.s32.totalorder %s115, %s118
    %p124 = scmp.eq.s32.totalorder %s15, 0
    %p125 = por %p123, %p124
    %p126 = scmp.ne.s32.totalorder %s115, %s118
    %p127 = scmp.eq.s32.totalorder %s20, 3
    %p128 = por %p126, %p127
    %p129 = scmp.ne.s32.totalorder %s118, %s119
    %p130 = scmp.eq.s32.totalorder %s20, 0
    %p131 = por %p129, %p130
    %p132 = scmp.ne.s32.totalorder %s118, %s119
    %p133 = scmp.eq.s32.totalorder %s21, 3
    %p134 = por %p132, %p133
    %p136 = scmp.ne.s32.totalorder %s119, %s135
    %p137 = scmp.eq.s32.totalorder %s21, 0
    %p138 = por %p136, %p137
    %s139 = sadd.s32 %s23, 1
    %p140 = scmp.lt.s32.totalorder %s139, 1
    %s141 = scalar_select %p140, %s139, 1
    %s142 = sadd.s32 %s30, 1
    %p143 = scmp.lt.s32.totalorder %s142, 1
    %s144 = scalar_select %p143, %s142, 1
    %s145 = ssub.s32 %s22, %s34
    %s146 = ssub.s32 %s141, %s144
    %s147 = sor.u32 %s145, %s146
    %p148 = scmp.eq.s32.totalorder %s147, 0
    %s150 = sadd.s32 %s149, 1
    %s151 = scalar_select %p148, %s149, %s150
    %p154 = pneg %p148
    %p155 = scmp.eq.s32.totalorder %s15, 3
    %p156 = por %p154, %p155
    %p157 = scmp.ne.s32.totalorder %s149, %s152
    %p158 = scmp.eq.s32.totalorder %s15, 0
    %p159 = por %p157, %p158
    %p160 = scmp.ne.s32.totalorder %s149, %s152
    %p161 = scmp.eq.s32.totalorder %s20, 3
    %p162 = por %p160, %p161
    %p163 = scmp.ne.s32.totalorder %s152, %s153
    %p164 = scmp.eq.s32.totalorder %s20, 0
    %p165 = por %p163, %p164
    %p166 = scmp.ne.s32.totalorder %s152, %s153
    %p167 = scmp.eq.s32.totalorder %s21, 3
    %p168 = por %p166, %p167
    %p170 = scmp.ne.s32.totalorder %s153, %s169
    %p171 = scmp.eq.s32.totalorder %s21, 0
    %p172 = por %p170, %p171
    %s174 = sadd.s32 %s173, 1
    %p177 = scmp.eq.s32.totalorder %s15, 3
    %p178 = scmp.ne.s32.totalorder %s173, %s175
    %p179 = scmp.eq.s32.totalorder %s15, 0
    %p180 = por %p178, %p179
    %p181 = scmp.ne.s32.totalorder %s173, %s175
    %p182 = scmp.eq.s32.totalorder %s20, 3
    %p183 = por %p181, %p182
    %p184 = scmp.ne.s32.totalorder %s175, %s176
    %p185 = scmp.eq.s32.totalorder %s20, 0
    %p186 = por %p184, %p185
    %p187 = scmp.ne.s32.totalorder %s175, %s176
    %p188 = scmp.eq.s32.totalorder %s21, 3
    %p189 = por %p187, %p188
    %p191 = scmp.ne.s32.totalorder %s176, %s190
    %p192 = scmp.eq.s32.totalorder %s21, 0
    %p193 = por %p191, %p192
    %s195 = sadd.s32 %s194, 1
    %p198 = scmp.eq.s32.totalorder %s15, 3
    %p199 = scmp.ne.s32.totalorder %s194, %s196
    %p200 = scmp.eq.s32.totalorder %s15, 0
    %p201 = por %p199, %p200
    %p202 = scmp.ne.s32.totalorder %s194, %s196
    %p203 = scmp.eq.s32.totalorder %s20, 3
    %p204 = por %p202, %p203
    %p205 = scmp.ne.s32.totalorder %s196, %s197
    %p206 = scmp.eq.s32.totalorder %s20, 0
    %p207 = por %p205, %p206
    %p208 = scmp.ne.s32.totalorder %s196, %s197
    %p209 = scmp.eq.s32.totalorder %s21, 3
    %p210 = por %p208, %p209
    %p212 = scmp.ne.s32.totalorder %s197, %s211
    %p213 = scmp.eq.s32.totalorder %s21, 0
    %p214 = por %p212, %p213
    %s216 = sadd.s32 %s215, 1
    %p219 = scmp.eq.s32.totalorder %s15, 3
    %p220 = scmp.ne.s32.totalorder %s215, %s217
    %p221 = scmp.eq.s32.totalorder %s15, 0
    %p222 = por %p220, %p221
    %p223 = scmp.ne.s32.totalorder %s215, %s217
    %p224 = scmp.eq.s32.totalorder %s20, 3
    %p225 = por %p223, %p224
    %p226 = scmp.ne.s32.totalorder %s217, %s218
    %p227 = scmp.eq.s32.totalorder %s20, 0
    %p228 = por %p226, %p227
    %p229 = scmp.ne.s32.totalorder %s217, %s218
    %p230 = scmp.eq.s32.totalorder %s21, 3
    %p231 = por %p229, %p230
    %p233 = scmp.ne.s32.totalorder %s218, %s232
    %p234 = scmp.eq.s32.totalorder %s21, 0
    %p235 = por %p233, %p234
    %s237 = sadd.s32 %s236, 1
    %p240 = scmp.eq.s32.totalorder %s15, 3
    %p241 = scmp.ne.s32.totalorder %s236, %s238
    %p242 = scmp.eq.s32.totalorder %s15, 0
    %p243 = por %p241, %p242
    %p244 = scmp.ne.s32.totalorder %s236, %s238
    %p245 = scmp.eq.s32.totalorder %s20, 3
    %p246 = por %p244, %p245
    %p247 = scmp.ne.s32.totalorder %s238, %s239
    %p248 = scmp.eq.s32.totalorder %s20, 0
    %p249 = por %p247, %p248
    %p250 = scmp.ne.s32.totalorder %s238, %s239
    %p251 = scmp.eq.s32.totalorder %s21, 3
    %p252 = por %p250, %p251
    %p254 = scmp.ne.s32.totalorder %s239, %s253
    %p255 = scmp.eq.s32.totalorder %s21, 0
    %p256 = por %p254, %p255
    %s257 = ssub.s32 %s22, %s34
    %s258 = ssub.s32 %s23, %s30
    %s259 = sor.u32 %s257, %s258
    %p260 = scmp.eq.s32.totalorder %s259, 0
    %s262 = sadd.s32 %s261, 1
    %s263 = scalar_select %p260, %s261, %s262
    %p266 = pneg %p260
    %p267 = scmp.eq.s32.totalorder %s15, 3
    %p268 = por %p266, %p267
    %p269 = scmp.ne.s32.totalorder %s261, %s264
    %p270 = scmp.eq.s32.totalorder %s15, 0
    %p271 = por %p269, %p270
    %p272 = scmp.ne.s32.totalorder %s261, %s264
    %p273 = scmp.eq.s32.totalorder %s20, 3
    %p274 = por %p272, %p273
    %p275 = scmp.ne.s32.totalorder %s264, %s265
    %p276 = scmp.eq.s32.totalorder %s20, 0
    %p277 = por %p275, %p276
    %p278 = scmp.ne.s32.totalorder %s264, %s265
    %p279 = scmp.eq.s32.totalorder %s21, 3
    %p280 = por %p278, %p279
    %p282 = scmp.ne.s32.totalorder %s265, %s281
    %p283 = scmp.eq.s32.totalorder %s21, 0
    %p284 = por %p282, %p283
    %p285 = scmp.le.s32.totalorder 1, %s15
    %p286 = scmp.lt.s32.totalorder %s15, 5
    %p287 = pnand %p285, %p286
    %p288 = pneg %p287
    // Predicated region
    $region9: #{double_conv_pallas.1} parent=5 // pred_check
      _
    $region10: #{double_conv_pallas.1} parent=5 // pred_check_branch
      %290 = sbr.rel (%p287) target = $region12
    $region11: #{double_conv_pallas.1} parent=5 // pred_region
      %s291 = ssub.s32 %s15, 1
      // Predicated region
      $region13: #{double_conv_pallas.1} parent=11 // pred_check
        %p292 = pneg %p48
      $region14: #{double_conv_pallas.1} parent=11 // pred_check_branch
        %294 = sbr.rel (%p292) target = $region16
      $region15: #{double_conv_pallas.1} parent=11 // pred_region
        _
      $region16: #{double_conv_pallas.1} parent=11 // pred_fallthru
        _
      // Predicated region
      $region17: #{double_conv_pallas.1} parent=11 // pred_check
        %p295 = pneg %p69
      $region18: #{double_conv_pallas.1} parent=11 // pred_check_branch
        %297 = sbr.rel (%p295) target = $region20
      $region19: #{double_conv_pallas.1} parent=11 // pred_region
        _
      $region20: #{double_conv_pallas.1} parent=11 // pred_fallthru
        _
      // Predicated region
      $region21: #{double_conv_pallas.1} parent=11 // pred_check
        %p298 = pneg %p186
      $region22: #{double_conv_pallas.1} parent=11 // pred_check_branch
        %300 = sbr.rel (%p298) target = $region24
      $region23: #{double_conv_pallas.1} parent=11 // pred_region
        _
      $region24: #{double_conv_pallas.1} parent=11 // pred_fallthru
        _
      // Predicated region
      $region25: #{double_conv_pallas.1} parent=11 // pred_check
        %p301 = pneg %p207
      $region26: #{double_conv_pallas.1} parent=11 // pred_check_branch
        %303 = sbr.rel (%p301) target = $region28
      $region27: #{double_conv_pallas.1} parent=11 // pred_region
        _
      $region28: #{double_conv_pallas.1} parent=11 // pred_fallthru
        _
      // Predicated region
      $region29: #{double_conv_pallas.1} parent=11 // pred_check
        %p304 = pneg %p228
      $region30: #{double_conv_pallas.1} parent=11 // pred_check_branch
        %306 = sbr.rel (%p304) target = $region32
      $region31: #{double_conv_pallas.1} parent=11 // pred_region
        _
      $region32: #{double_conv_pallas.1} parent=11 // pred_fallthru
        _
      // Predicated region
      $region33: #{double_conv_pallas.1} parent=11 // pred_check
        %p307 = pneg %p249
      $region34: #{double_conv_pallas.1} parent=11 // pred_check_branch
        %309 = sbr.rel (%p307) target = $region36
      $region35: #{double_conv_pallas.1} parent=11 // pred_region
        _
      $region36: #{double_conv_pallas.1} parent=11 // pred_fallthru
        _
    $region12: #{double_conv_pallas.1} parent=5 // pred_fallthru
      _
    %p310 = scmp.lt.s32.totalorder %s15, 4
    // Predicated region
    $region37: #{double_conv_pallas.1} parent=5 // pred_check
      %p311 = pneg %p310
    $region38: #{double_conv_pallas.1} parent=5 // pred_check_branch
      %313 = sbr.rel (%p311) target = $region40
    $region39: #{double_conv_pallas.1} parent=5 // pred_region
      // Predicated region
      $region41: #{double_conv_pallas.1} parent=39 // pred_check
        %p314 = pneg %p91
      $region42: #{double_conv_pallas.1} parent=39 // pred_check_branch
        %316 = sbr.rel (%p314) target = $region44
      $region43: #{double_conv_pallas.1} parent=39 // pred_region
        %p317 = scmp.lt.s32.totalorder %s22, 1
        %s318 = scalar_select %p317, %s22, 1
        %p319 = scmp.lt.s32.totalorder %s23, 1
        %s320 = scalar_select %p319, %s23, 1
        %s321 = smul.addr %s318, 2
        %s322 = sadd.s32 %s320, %s321
        %s323 = smul.addr %s322, 8
        %s324 = scalar_lea.vmem %s2, %s323
      $region44: #{double_conv_pallas.1} parent=39 // pred_fallthru
        _
      // Predicated region
      $region45: #{double_conv_pallas.1} parent=39 // pred_check
        %p325 = pneg %p125
      $region46: #{double_conv_pallas.1} parent=39 // pred_check_branch
        %327 = sbr.rel (%p325) target = $region48
      $region47: #{double_conv_pallas.1} parent=39 // pred_region
        %s328 = ssub.s32 %s23, 1
        %p329 = scmp.gt.s32.totalorder %s328, 0
        %s330 = scalar_select %p329, %s328, 0
        %p331 = scmp.lt.s32.totalorder %s22, 1
        %s332 = scalar_select %p331, %s22, 1
        %p333 = scmp.lt.s32.totalorder %s330, 1
        %s334 = scalar_select %p333, %s330, 1
        %s335 = smul.addr %s332, 2
        %s336 = sadd.s32 %s334, %s335
        %s337 = smul.addr %s336, 8
        %s338 = scalar_lea.vmem %s3, %s337
        %s339 = ssub.s32 %s23, 1
        %p340 = scmp.gt.s32.totalorder %s339, 0
        %s341 = scalar_select %p340, %s339, 0
      $region48: #{double_conv_pallas.1} parent=39 // pred_fallthru
        _
      // Predicated region
      $region49: #{double_conv_pallas.1} parent=39 // pred_check
        %p342 = pneg %p159
      $region50: #{double_conv_pallas.1} parent=39 // pred_check_branch
        %344 = sbr.rel (%p342) target = $region52
      $region51: #{double_conv_pallas.1} parent=39 // pred_region
        %s345 = sadd.s32 %s23, 1
        %p346 = scmp.lt.s32.totalorder %s345, 1
        %s347 = scalar_select %p346, %s345, 1
        %p348 = scmp.lt.s32.totalorder %s22, 1
        %s349 = scalar_select %p348, %s22, 1
        %p350 = scmp.lt.s32.totalorder %s347, 1
        %s351 = scalar_select %p350, %s347, 1
        %s352 = smul.addr %s349, 2
        %s353 = sadd.s32 %s351, %s352
        %s354 = smul.addr %s353, 8
        %s355 = scalar_lea.vmem %s4, %s354
        %s356 = sadd.s32 %s23, 1
        %p357 = scmp.lt.s32.totalorder %s356, 1
        %s358 = scalar_select %p357, %s356, 1
      $region52: #{double_conv_pallas.1} parent=39 // pred_fallthru
        _
    $region40: #{double_conv_pallas.1} parent=5 // pred_fallthru
      _
    %p359 = scmp.le.s32.totalorder 1, %s15
    %p360 = scmp.lt.s32.totalorder %s15, 5
    %p361 = pnand %p359, %p360
    %p362 = pneg %p361
    // Predicated region
    $region53: #{double_conv_pallas.1} parent=5 // pred_check
      _
    $region54: #{double_conv_pallas.1} parent=5 // pred_check_branch
      %364 = sbr.rel (%p361) target = $region56
    $region55: #{double_conv_pallas.1} parent=5 // pred_region
      %s365 = ssub.s32 %s15, 1
      %p366 = pneg %p48
      %p367 = pneg %p45
      %p368 = pneg %p69
      %p369 = pneg %p66
      %p370 = scmp.lt.s32.totalorder %s24, 1
      %s371 = scalar_select %p370, %s24, 1
      %p372 = scmp.lt.s32.totalorder %s25, 1
      %s373 = scalar_select %p372, %s25, 1
      %s374 = smul.addr %s371, 2
      %s375 = sadd.s32 %s373, %s374
      %s376 = smul.addr %s375, 8
      %s377 = scalar_lea.vmem %s2, %s376
      %p378 = pneg %p97
      %p379 = pneg %p94
      %s380 = ssub.s32 %s25, 1
      %p381 = scmp.gt.s32.totalorder %s380, 0
      %s382 = scalar_select %p381, %s380, 0
      %p383 = scmp.lt.s32.totalorder %s24, 1
      %s384 = scalar_select %p383, %s24, 1
      %p385 = scmp.lt.s32.totalorder %s382, 1
      %s386 = scalar_select %p385, %s382, 1
      %s387 = smul.addr %s384, 2
      %s388 = sadd.s32 %s386, %s387
      %s389 = smul.addr %s388, 8
      %s390 = scalar_lea.vmem %s3, %s389
      %p391 = pneg %p131
      %p392 = pneg %p128
      %s393 = sadd.s32 %s25, 1
      %p394 = scmp.lt.s32.totalorder %s393, 1
      %s395 = scalar_select %p394, %s393, 1
      %p396 = scmp.lt.s32.totalorder %s24, 1
      %s397 = scalar_select %p396, %s24, 1
      %p398 = scmp.lt.s32.totalorder %s395, 1
      %s399 = scalar_select %p398, %s395, 1
      %s400 = smul.addr %s397, 2
      %s401 = sadd.s32 %s399, %s400
      %s402 = smul.addr %s401, 8
      %s403 = scalar_lea.vmem %s4, %s402
      %p404 = pneg %p165
      %p405 = pneg %p162
      %p406 = pneg %p186
      %p407 = pneg %p183
      %p408 = pneg %p207
      %p409 = pneg %p204
      %p410 = pneg %p228
      %p411 = pneg %p225
      %p412 = pneg %p249
      %p413 = pneg %p246
      %p414 = pneg %p277
      %p415 = pneg %p274
      %p416 = scmp.lt.s32.totalorder %s24, 1
      %s417 = scalar_select %p416, %s24, 1
      %p418 = scmp.lt.s32.totalorder %s25, 1
      %s419 = scalar_select %p418, %s25, 1
      %s420 = smul.addr %s417, 2
      %s421 = sadd.s32 %s419, %s420
      %s422 = smul.addr %s421, 8
      %s423 = scalar_lea.vmem %s9, %s422
      %p424 = scmp.lt.s32.totalorder %s24, 1
      %s425 = scalar_select %p424, %s24, 1
      %p426 = scmp.lt.s32.totalorder %s25, 1
      %s427 = scalar_select %p426, %s25, 1
      %s428 = smul.addr %s425, 2
      %s429 = sadd.s32 %s427, %s428
      %s430 = smul.addr %s429, 8
      %s431 = scalar_lea.vmem %s2, %s430
      %s432 = ssub.s32 %s25, 1
      %p433 = scmp.gt.s32.totalorder %s432, 0
      %s434 = scalar_select %p433, %s432, 0
      %p435 = scmp.lt.s32.totalorder %s24, 1
      %s436 = scalar_select %p435, %s24, 1
      %p437 = scmp.lt.s32.totalorder %s434, 1
      %s438 = scalar_select %p437, %s434, 1
      %s439 = smul.addr %s436, 2
      %s440 = sadd.s32 %s438, %s439
      %s441 = smul.addr %s440, 8
      %s442 = scalar_lea.vmem %s3, %s441
      %s443 = ssub.s32 %s25, 1
      %p444 = scmp.gt.s32.totalorder %s443, 0
      %s445 = scalar_select %p444, %s443, 0
      %s446 = sadd.s32 %s25, 1
      %p447 = scmp.lt.s32.totalorder %s446, 1
      %s448 = scalar_select %p447, %s446, 1
      %p449 = scmp.lt.s32.totalorder %s24, 1
      %s450 = scalar_select %p449, %s24, 1
      %p451 = scmp.lt.s32.totalorder %s448, 1
      %s452 = scalar_select %p451, %s448, 1
      %s453 = smul.addr %s450, 2
      %s454 = sadd.s32 %s452, %s453
      %s455 = smul.addr %s454, 8
      %s456 = scalar_lea.vmem %s4, %s455
      %s457 = sadd.s32 %s25, 1
      %p458 = scmp.lt.s32.totalorder %s457, 1
      %s459 = scalar_select %p458, %s457, 1
      %p460 = scmp.lt.s32.totalorder %s24, 1
      %s461 = scalar_select %p460, %s24, 1
      %p462 = scmp.lt.s32.totalorder %s25, 1
      %s463 = scalar_select %p462, %s25, 1
      %s464 = smul.addr %s461, 2
      %s465 = sadd.s32 %s463, %s464
      %s466 = smul.addr %s465, 8
      %s467 = scalar_lea.vmem %s9, %s466
      %vm468 = vcmask 916480
      %469 = vst.msk [vmem:[#allocation2] sm:$0xff] %vm468, 0.0
      %470 = vst.msk [vmem:[#allocation2 + $0x18] sm:$0xff] %vm468, 0.0
      %vm471 = vcmask 1047680
      %472 = vst.msk [vmem:[#allocation2 + $0x10] sm:$0xff] %vm471, 0.0
      %473 = vst.msk [vmem:[#allocation2 + $0x28] sm:$0xff] %vm471, 0.0
      %v474 = vld [vmem:[%s5] sm:$0xff]
      %v475 = vld [vmem:[%s5 + $0x8] sm:$0xff]
      %v476 = vld [vmem:[%s431] sm:$0xff]
      %v477 = vld [vmem:[%s6] sm:$0xff]
      %v478 = vld [vmem:[%s6 + $0x8] sm:$0xff]
      %480 = vset.pattern.permute.xlu0 0
      %481 = vperm.xlu0 %480, %v477
      %v482 = vpop.permute.xlu0 %481
      %485 = vset.pattern.permute.xlu0 0
      %486 = vperm.xlu0 %485, %v478
      %v487 = vpop.permute.xlu0 %486
      %vm489 = vcmask 64512
      %v491 = vsel %vm489, %v474, 0
      %v494 = vsel %vm489, %v475, 0
      %496 = vmatprep.subr.mxu0 0.0
      %497 = vmatpush1.msra.mxu0 %v476
      %498 = vmatprep.subr.mxu0 0.0
      %499 = vmatpush1.msra.mxu0 0.0
      %500 = vmatprep.subr.mxu0 0.0
      %501 = vmatpush1.msra.mxu0 0.0
      %502 = vmatprep.subr.mxu0 0.0
      %503 = vmatpush1.msra.mxu0 0.0
      %504 = vmatprep.subr.mxu0 0.0
      %505 = vmatpush1.msra.mxu0 0.0
      %506 = vmatprep.subr.mxu0 0.0
      %507 = vmatpush1.msra.mxu0 0.0
      %508 = vmatprep.subr.mxu0 0.0
      %509 = vmatpush1.msra.mxu0 0.0
      %510 = vmatprep.subr.mxu0 0.0
      %511 = vmatpush1.msra.mxu0 0.0
      %512 = vmatprep.subr.mxu0 0.0
      %513 = vmatpush1.msra.mxu0 0.0
      %514 = vmatprep.subr.mxu0 0.0
      %515 = vmatpush1.msra.mxu0 0.0
      %516 = vmatprep.subr.mxu0 0.0
      %517 = vmatpush1.msra.mxu0 0.0
      %518 = vmatprep.subr.mxu0 0.0
      %519 = vmatpush1.msra.mxu0 0.0
      %520 = vmatprep.subr.mxu0 0.0
      %521 = vmatpush1.msra.mxu0 0.0
      %522 = vmatprep.subr.mxu0 0.0
      %523 = vmatpush1.msra.mxu0 0.0
      %524 = vmatprep.subr.mxu0 0.0
      %525 = vmatpush1.msra.mxu0 0.0
      %526 = vmatprep.subr.mxu0 0.0
      %527 = vmatpush1.msra.mxu0 0.0
      %528 = vmatprep.subr.mxu0 0.0
      %529 = vmatpush1.msra.mxu0 0.0
      %530 = vmatprep.subr.mxu0 0.0
      %531 = vmatpush1.msra.mxu0 0.0
      %532 = vmatprep.subr.mxu0 0.0
      %533 = vmatpush1.msra.mxu0 0.0
      %534 = vmatprep.subr.mxu0 0.0
      %535 = vmatpush1.msra.mxu0 0.0
      %536 = vmatprep.subr.mxu0 0.0
      %537 = vmatpush1.msra.mxu0 0.0
      %538 = vmatprep.subr.mxu0 0.0
      %539 = vmatpush1.msra.mxu0 0.0
      %540 = vmatprep.subr.mxu0 0.0
      %541 = vmatpush1.msra.mxu0 0.0
      %542 = vmatprep.subr.mxu0 0.0
      %543 = vmatpush1.msra.mxu0 0.0
      %544 = vmatprep.subr.mxu0 0.0
      %545 = vmatpush1.msra.mxu0 0.0
      %546 = vmatprep.subr.mxu0 0.0
      %547 = vmatpush1.msra.mxu0 0.0
      %548 = vmatprep.subr.mxu0 0.0
      %549 = vmatpush1.msra.mxu0 0.0
      %550 = vmatprep.subr.mxu0 0.0
      %551 = vmatpush1.msra.mxu0 0.0
      %552 = vmatprep.subr.mxu0 0.0
      %553 = vmatpush1.msra.mxu0 0.0
      %554 = vmatprep.subr.mxu0 0.0
      %555 = vmatpush1.msra.mxu0 0.0
      %556 = vmatprep.subr.mxu0 0.0
      %557 = vmatpush1.msra.mxu0 0.0
      %558 = vmatprep.subr.mxu0 0.0
      %559 = vmatpush1.msra.mxu0 0.0
      %560 = vmatprep.mubr.f32.mxu0 0.0
      %561 = vmatmul.mubr.f32.gmra.mrb[0].mxu0 %v491
      %v562 = vpop.f32.mrb[0].mxu0
      %v563 = vadd.f32 %v482, %v562
      %v564 = vpop.f32.mrb[0].mxu0
      %565 = vmatprep.mubr.f32.mxu0 0.0
      %566 = vmatmul.mubr.f32.gmra.mrb[0].mxu0 %v494
      %v567 = vpop.f32.mrb[0].mxu0
      %v568 = vadd.f32 %v487, %v567
      %v569 = vpop.f32.mrb[0].mxu0
      %570 = vdwg.mxu0
      %v571 = vmax.f32 %v563, 0.0
      %v572 = vmax.f32 %v568, 0.0
      %573 = vst [vmem:[#allocation2 + $0x8] sm:$0xff] %v571
      %574 = vst [vmem:[#allocation2 + $0x20] sm:$0xff] %v572
      %v575 = vld [vmem:[%s442] sm:$0xff]
      %v576 = vld [vmem:[%s456] sm:$0xff]
      %p577 = scmp.gt.s32.totalorder %s25, 0
      %s578 = scalar_select %p577, 1, 0
      %s579 = scvt.s32.f32 %s578
      %p580 = scmp.lt.s32.totalorder %s25, 1
      %s581 = scalar_select %p580, 1, 0
      %s582 = scvt.s32.f32 %s581
      %v583 = vld [vmem:[%s5] sm:$0xff]
      %v584 = vld [vmem:[%s5 + $0x8] sm:$0xff]
      %v585 = vld [vmem:[%s6] sm:$0xff]
      %v586 = vld [vmem:[%s6 + $0x8] sm:$0xff]
      %588 = vset.pattern.permute.xlu0 0
      %589 = vperm.xlu0 %588, %v585
      %v590 = vpop.permute.xlu0 %589
      %593 = vset.pattern.permute.xlu0 0
      %594 = vperm.xlu0 %593, %v586
      %v595 = vpop.permute.xlu0 %594
      %598 = vrot.lane.b32.xlu0 %v575, 16
      %v599 = vpop.permute.xlu0 %598
      %v602 = vsel %vm489, %v583, 0
      %v605 = vsel %vm489, %v584, 0
      %607 = vmatprep.subr.mxu0 0.0
      %608 = vmatpush1.msra.mxu0 %v599
      %609 = vmatprep.subr.mxu0 0.0
      %610 = vmatpush1.msra.mxu0 0.0
      %611 = vmatprep.subr.mxu0 0.0
      %612 = vmatpush1.msra.mxu0 0.0
      %613 = vmatprep.subr.mxu0 0.0
      %614 = vmatpush1.msra.mxu0 0.0
      %615 = vmatprep.subr.mxu0 0.0
      %616 = vmatpush1.msra.mxu0 0.0
      %617 = vmatprep.subr.mxu0 0.0
      %618 = vmatpush1.msra.mxu0 0.0
      %619 = vmatprep.subr.mxu0 0.0
      %620 = vmatpush1.msra.mxu0 0.0
      %621 = vmatprep.subr.mxu0 0.0
      %622 = vmatpush1.msra.mxu0 0.0
      %623 = vmatprep.subr.mxu0 0.0
      %624 = vmatpush1.msra.mxu0 0.0
      %625 = vmatprep.subr.mxu0 0.0
      %626 = vmatpush1.msra.mxu0 0.0
      %627 = vmatprep.subr.mxu0 0.0
      %628 = vmatpush1.msra.mxu0 0.0
      %629 = vmatprep.subr.mxu0 0.0
      %630 = vmatpush1.msra.mxu0 0.0
      %631 = vmatprep.subr.mxu0 0.0
      %632 = vmatpush1.msra.mxu0 0.0
      %633 = vmatprep.subr.mxu0 0.0
      %634 = vmatpush1.msra.mxu0 0.0
      %635 = vmatprep.subr.mxu0 0.0
      %636 = vmatpush1.msra.mxu0 0.0
      %637 = vmatprep.subr.mxu0 0.0
      %638 = vmatpush1.msra.mxu0 0.0
      %639 = vmatprep.subr.mxu0 0.0
      %640 = vmatpush1.msra.mxu0 0.0
      %641 = vmatprep.subr.mxu0 0.0
      %642 = vmatpush1.msra.mxu0 0.0
      %643 = vmatprep.subr.mxu0 0.0
      %644 = vmatpush1.msra.mxu0 0.0
      %645 = vmatprep.subr.mxu0 0.0
      %646 = vmatpush1.msra.mxu0 0.0
      %647 = vmatprep.subr.mxu0 0.0
      %648 = vmatpush1.msra.mxu0 0.0
      %649 = vmatprep.subr.mxu0 0.0
      %650 = vmatpush1.msra.mxu0 0.0
      %651 = vmatprep.subr.mxu0 0.0
      %652 = vmatpush1.msra.mxu0 0.0
      %653 = vmatprep.subr.mxu0 0.0
      %654 = vmatpush1.msra.mxu0 0.0
      %655 = vmatprep.subr.mxu0 0.0
      %656 = vmatpush1.msra.mxu0 0.0
      %657 = vmatprep.subr.mxu0 0.0
      %658 = vmatpush1.msra.mxu0 0.0
      %659 = vmatprep.subr.mxu0 0.0
      %660 = vmatpush1.msra.mxu0 0.0
      %661 = vmatprep.subr.mxu0 0.0
      %662 = vmatpush1.msra.mxu0 0.0
      %663 = vmatprep.subr.mxu0 0.0
      %664 = vmatpush1.msra.mxu0 0.0
      %665 = vmatprep.subr.mxu0 0.0
      %666 = vmatpush1.msra.mxu0 0.0
      %667 = vmatprep.subr.mxu0 0.0
      %668 = vmatpush1.msra.mxu0 0.0
      %669 = vmatprep.subr.mxu0 0.0
      %670 = vmatpush1.msra.mxu0 0.0
      %671 = vmatprep.mubr.f32.mxu0 0.0
      %672 = vmatmul.mubr.f32.gmra.mrb[0].mxu0 %v602
      %v673 = vpop.f32.mrb[0].mxu0
      %v674 = vadd.f32 %v590, %v673
      %v675 = vpop.f32.mrb[0].mxu0
      %676 = vmatprep.mubr.f32.mxu0 0.0
      %677 = vmatmul.mubr.f32.gmra.mrb[0].mxu0 %v605
      %v678 = vpop.f32.mrb[0].mxu0
      %v679 = vadd.f32 %v595, %v678
      %v680 = vpop.f32.mrb[0].mxu0
      %681 = vdwg.mxu0
      %v682 = vmax.f32 %v674, 0.0
      %v683 = vmax.f32 %v679, 0.0
      %v684 = vstv %s579
      %v685 = vmul.f32 %v682, %v684
      %v686 = vmul.f32 %v683, %v684
      %687 = vmatprep.subr.mxu0 0.0
      %688 = vmatpush1.msra.mxu0 %v576
      %689 = vmatprep.subr.mxu0 0.0
      %690 = vmatpush1.msra.mxu0 0.0
      %691 = vmatprep.subr.mxu0 0.0
      %692 = vmatpush1.msra.mxu0 0.0
      %693 = vmatprep.subr.mxu0 0.0
      %694 = vmatpush1.msra.mxu0 0.0
      %695 = vmatprep.subr.mxu0 0.0
      %696 = vmatpush1.msra.mxu0 0.0
      %697 = vmatprep.subr.mxu0 0.0
      %698 = vmatpush1.msra.mxu0 0.0
      %699 = vmatprep.subr.mxu0 0.0
      %700 = vmatpush1.msra.mxu0 0.0
      %701 = vmatprep.subr.mxu0 0.0
      %702 = vmatpush1.msra.mxu0 0.0
      %703 = vmatprep.subr.mxu0 0.0
      %704 = vmatpush1.msra.mxu0 0.0
      %705 = vmatprep.subr.mxu0 0.0
      %706 = vmatpush1.msra.mxu0 0.0
      %707 = vmatprep.subr.mxu0 0.0
      %708 = vmatpush1.msra.mxu0 0.0
      %709 = vmatprep.subr.mxu0 0.0
      %710 = vmatpush1.msra.mxu0 0.0
      %711 = vmatprep.subr.mxu0 0.0
      %712 = vmatpush1.msra.mxu0 0.0
      %713 = vmatprep.subr.mxu0 0.0
      %714 = vmatpush1.msra.mxu0 0.0
      %715 = vmatprep.subr.mxu0 0.0
      %716 = vmatpush1.msra.mxu0 0.0
      %717 = vmatprep.subr.mxu0 0.0
      %718 = vmatpush1.msra.mxu0 0.0
      %719 = vmatprep.subr.mxu0 0.0
      %720 = vmatpush1.msra.mxu0 0.0
      %721 = vmatprep.subr.mxu0 0.0
      %722 = vmatpush1.msra.mxu0 0.0
      %723 = vmatprep.subr.mxu0 0.0
      %724 = vmatpush1.msra.mxu0 0.0
      %725 = vmatprep.subr.mxu0 0.0
      %726 = vmatpush1.msra.mxu0 0.0
      %727 = vmatprep.subr.mxu0 0.0
      %728 = vmatpush1.msra.mxu0 0.0
      %729 = vmatprep.subr.mxu0 0.0
      %730 = vmatpush1.msra.mxu0 0.0
      %731 = vmatprep.subr.mxu0 0.0
      %732 = vmatpush1.msra.mxu0 0.0
      %733 = vmatprep.subr.mxu0 0.0
      %734 = vmatpush1.msra.mxu0 0.0
      %735 = vmatprep.subr.mxu0 0.0
      %736 = vmatpush1.msra.mxu0 0.0
      %737 = vmatprep.subr.mxu0 0.0
      %738 = vmatpush1.msra.mxu0 0.0
      %739 = vmatprep.subr.mxu0 0.0
      %740 = vmatpush1.msra.mxu0 0.0
      %741 = vmatprep.subr.mxu0 0.0
      %742 = vmatpush1.msra.mxu0 0.0
      %743 = vmatprep.subr.mxu0 0.0
      %744 = vmatpush1.msra.mxu0 0.0
      %745 = vmatprep.subr.mxu0 0.0
      %746 = vmatpush1.msra.mxu0 0.0
      %747 = vmatprep.subr.mxu0 0.0
      %748 = vmatpush1.msra.mxu0 0.0
      %749 = vmatprep.subr.mxu0 0.0
      %750 = vmatpush1.msra.mxu0 0.0
      %751 = vmatprep.mubr.f32.mxu0 0.0
      %752 = vmatmul.mubr.f32.gmra.mrb[0].mxu0 %v602
      %v753 = vpop.f32.mrb[0].mxu0
      %v754 = vadd.f32 %v590, %v753
      %v755 = vpop.f32.mrb[0].mxu0
      %756 = vmatprep.mubr.f32.mxu0 0.0
      %757 = vmatmul.mubr.f32.gmra.mrb[0].mxu0 %v605
      %v758 = vpop.f32.mrb[0].mxu0
      %v759 = vadd.f32 %v595, %v758
      %v760 = vpop.f32.mrb[0].mxu0
      %761 = vdwg.mxu0
      %v762 = vmax.f32 %v754, 0.0
      %v763 = vmax.f32 %v759, 0.0
      %v764 = vstv %s582
      %v765 = vmul.f32 %v762, %v764
      %v766 = vmul.f32 %v763, %v764
      %769 = vrot.lane.b32.xlu0 %v685, 112
      %v770 = vpop.permute.xlu0 %769
      %771 = vrot.lane.b32.xlu0 %v686, 112
      %v772 = vpop.permute.xlu0 %771
      %vm775 = vcmask 1048448
      %776 = vst.msk [vmem:[#allocation2] sm:$0xff] %vm775, %v770
      %777 = vst.msk [vmem:[#allocation2 + $0x18] sm:$0xff] %vm775, %v772
      %vm778 = vcmask 130048
      %779 = vst.msk [vmem:[#allocation2 + $0x10] sm:$0xff] %vm778, %v765
      %780 = vst.msk [vmem:[#allocation2 + $0x28] sm:$0xff] %vm778, %v766
      %v781 = vld [vmem:[%s0] sm:$0x1]
      %v782 = vld [vmem:[%s1] sm:$0x1]
      %v783 = vld [vmem:[#allocation2] sm:$0xff]
      %v784 = vld [vmem:[#allocation2 + $0x8] sm:$0xff]
      %v785 = vld [vmem:[#allocation2 + $0x18] sm:$0xff]
      %v786 = vld [vmem:[#allocation2 + $0x20] sm:$0xff]
      %v788 = vlaneseq
      %v789 = vshrl.u32 %v788, 7
      %v790 = vsub.s32 0, %v789
      %v791 = vrot.slane %v781, %v790
      %792 = vrot.lane.b32.xlu0 %v791, 111
      %v793 = vpop.permute.xlu0 %792
      %v795 = vmul.f32 %v783, %v793
      %v796 = vmul.f32 %v784, %v793
      %v797 = vmul.f32 %v785, %v793
      %v798 = vmul.f32 %v786, %v793
      %803 = vrot.lane.b32.xlu0 %v795, 17
      %v804 = vpop.permute.xlu0 %803
      %805 = vrot.lane.b32.xlu0 %v796, 17
      %v806 = vpop.permute.xlu0 %805
      %807 = vrot.lane.b32.xlu0 %v797, 17
      %v808 = vpop.permute.xlu0 %807
      %809 = vrot.lane.b32.xlu0 %v798, 17
      %v810 = vpop.permute.xlu0 %809
      %vm811 = vcmask 138240
      %v812 = vsel %vm811, %v804, %v806
      %v813 = vsel %vm811, %v808, %v810
      %816 = vst [vmem:[#allocation3] sm:$0xff] %v812
      %817 = vst [vmem:[#allocation3 + $0x8] sm:$0xff] %v813
      %v818 = vld [vmem:[#allocation2] sm:$0xff]
      %v819 = vld [vmem:[#allocation2 + $0x8] sm:$0xff]
      %v820 = vld [vmem:[#allocation2 + $0x18] sm:$0xff]
      %v821 = vld [vmem:[#allocation2 + $0x20] sm:$0xff]
      %826 = vrot.lane.b32.xlu0 %v818, 16
      %v827 = vpop.permute.xlu0 %826
      %828 = vrot.lane.b32.xlu0 %v819, 16
      %v829 = vpop.permute.xlu0 %828
      %830 = vrot.lane.b32.xlu0 %v820, 16
      %v831 = vpop.permute.xlu0 %830
      %832 = vrot.lane.b32.xlu0 %v821, 16
      %v833 = vpop.permute.xlu0 %832
      %v834 = vsel %vm778, %v827, %v829
      %v835 = vsel %vm778, %v831, %v833
      %838 = vst [vmem:[#allocation3 + $0x10] sm:$0xff] %v834
      %839 = vst [vmem:[#allocation3 + $0x18] sm:$0xff] %v835
      %v840 = vld [vmem:[#allocation2] sm:$0xff]
      %v841 = vld [vmem:[#allocation2 + $0x8] sm:$0xff]
      %v842 = vld [vmem:[#allocation2 + $0x18] sm:$0xff]
      %v843 = vld [vmem:[#allocation2 + $0x20] sm:$0xff]
      %v845 = vlaneseq
      %v846 = vshrl.u32 %v845, 7
      %v847 = vsub.s32 0, %v846
      %v848 = vrot.slane %v782, %v847
      %849 = vrot.lane.b32.xlu0 %v848, 113
      %v850 = vpop.permute.xlu0 %849
      %v852 = vmul.f32 %v840, %v850
      %v853 = vmul.f32 %v841, %v850
      %v854 = vmul.f32 %v842, %v850
      %v855 = vmul.f32 %v843, %v850
      %860 = vrot.lane.b32.xlu0 %v852, 15
      %v861 = vpop.permute.xlu0 %860
      %862 = vrot.lane.b32.xlu0 %v853, 15
      %v863 = vpop.permute.xlu0 %862
      %864 = vrot.lane.b32.xlu0 %v854, 15
      %v865 = vpop.permute.xlu0 %864
      %866 = vrot.lane.b32.xlu0 %v855, 15
      %v867 = vpop.permute.xlu0 %866
      %vm868 = vcmask 121856
      %v869 = vsel %vm868, %v861, %v863
      %v870 = vsel %vm868, %v865, %v867
      %873 = vst [vmem:[#allocation3 + $0x20] sm:$0xff] %v869
      %874 = vst [vmem:[#allocation3 + $0x28] sm:$0xff] %v870
      %v875 = vld [vmem:[#allocation2] sm:$0xff]
      %v876 = vld [vmem:[#allocation2 + $0x8] sm:$0xff]
      %v877 = vld [vmem:[#allocation2 + $0x18] sm:$0xff]
      %v878 = vld [vmem:[#allocation2 + $0x20] sm:$0xff]
      %879 = vrot.lane.b32.xlu0 %v791, 127
      %v880 = vpop.permute.xlu0 %879
      %v882 = vmul.f32 %v875, %v880
      %v883 = vmul.f32 %v876, %v880
      %v884 = vmul.f32 %v877, %v880
      %v885 = vmul.f32 %v878, %v880
      %890 = vrot.lane.b32.xlu0 %v882, 1
      %v891 = vpop.permute.xlu0 %890
      %892 = vrot.lane.b32.xlu0 %v883, 1
      %v893 = vpop.permute.xlu0 %892
      %894 = vrot.lane.b32.xlu0 %v884, 1
      %v895 = vpop.permute.xlu0 %894
      %896 = vrot.lane.b32.xlu0 %v885, 1
      %v897 = vpop.permute.xlu0 %896
      %vm898 = vcmask 7168
      %v899 = vsel %vm898, %v891, %v893
      %v900 = vsel %vm898, %v895, %v897
      %903 = vst [vmem:[#allocation3 + $0x30] sm:$0xff] %v899
      %904 = vst [vmem:[#allocation3 + $0x38] sm:$0xff] %v900
      %v905 = vld [vmem:[#allocation2 + $0x8] sm:$0xff]
      %v906 = vld [vmem:[#allocation2 + $0x20] sm:$0xff]
      %907 = vst [vmem:[#allocation3 + $0x40] sm:$0xff] %v905
      %908 = vst [vmem:[#allocation3 + $0x48] sm:$0xff] %v906
      %v909 = vld [vmem:[#allocation2 + $0x8] sm:$0xff]
      %v910 = vld [vmem:[#allocation2 + $0x10] sm:$0xff]
      %v911 = vld [vmem:[#allocation2 + $0x20] sm:$0xff]
      %v912 = vld [vmem:[#allocation2 + $0x28] sm:$0xff]
      %913 = vrot.lane.b32.xlu0 %v848, 1
      %v914 = vpop.permute.xlu0 %913
      %v916 = vmul.f32 %v909, %v914
      %v917 = vmul.f32 %v910, %v914
      %v918 = vmul.f32 %v911, %v914
      %v919 = vmul.f32 %v912, %v914
      %924 = vrot.lane.b32.xlu0 %v916, 127
      %v925 = vpop.permute.xlu0 %924
      %926 = vrot.lane.b32.xlu0 %v917, 127
      %v927 = vpop.permute.xlu0 %926
      %928 = vrot.lane.b32.xlu0 %v918, 127
      %v929 = vpop.permute.xlu0 %928
      %930 = vrot.lane.b32.xlu0 %v919, 127
      %v931 = vpop.permute.xlu0 %930
      %vm932 = vcmask 1039360
      %v933 = vsel %vm932, %v925, %v927
      %v934 = vsel %vm932, %v929, %v931
      %937 = vst [vmem:[#allocation3 + $0x50] sm:$0xff] %v933
      %938 = vst [vmem:[#allocation3 + $0x58] sm:$0xff] %v934
      %v939 = vld [vmem:[#allocation2 + $0x8] sm:$0xff]
      %v940 = vld [vmem:[#allocation2 + $0x10] sm:$0xff]
      %v941 = vld [vmem:[#allocation2 + $0x20] sm:$0xff]
      %v942 = vld [vmem:[#allocation2 + $0x28] sm:$0xff]
      %943 = vrot.lane.b32.xlu0 %v791, 15
      %v944 = vpop.permute.xlu0 %943
      %v946 = vmul.f32 %v939, %v944
      %v947 = vmul.f32 %v940, %v944
      %v948 = vmul.f32 %v941, %v944
      %v949 = vmul.f32 %v942, %v944
      %954 = vrot.lane.b32.xlu0 %v946, 113
      %v955 = vpop.permute.xlu0 %954
      %956 = vrot.lane.b32.xlu0 %v947, 113
      %v957 = vpop.permute.xlu0 %956
      %958 = vrot.lane.b32.xlu0 %v948, 113
      %v959 = vpop.permute.xlu0 %958
      %960 = vrot.lane.b32.xlu0 %v949, 113
      %v961 = vpop.permute.xlu0 %960
      %vm962 = vcmask 924672
      %v963 = vsel %vm962, %v955, %v957
      %v964 = vsel %vm962, %v959, %v961
      %967 = vst [vmem:[#allocation3 + $0x60] sm:$0xff] %v963
      %968 = vst [vmem:[#allocation3 + $0x68] sm:$0xff] %v964
      %v969 = vld [vmem:[#allocation2 + $0x8] sm:$0xff]
      %v970 = vld [vmem:[#allocation2 + $0x10] sm:$0xff]
      %v971 = vld [vmem:[#allocation2 + $0x20] sm:$0xff]
      %v972 = vld [vmem:[#allocation2 + $0x28] sm:$0xff]
      %977 = vrot.lane.b32.xlu0 %v969, 112
      %v978 = vpop.permute.xlu0 %977
      %979 = vrot.lane.b32.xlu0 %v970, 112
      %v980 = vpop.permute.xlu0 %979
      %981 = vrot.lane.b32.xlu0 %v971, 112
      %v982 = vpop.permute.xlu0 %981
      %983 = vrot.lane.b32.xlu0 %v972, 112
      %v984 = vpop.permute.xlu0 %983
      %v985 = vsel %vm468, %v978, %v980
      %v986 = vsel %vm468, %v982, %v984
      %989 = vst [vmem:[#allocation3 + $0x70] sm:$0xff] %v985
      %990 = vst [vmem:[#allocation3 + $0x78] sm:$0xff] %v986
      %v991 = vld [vmem:[#allocation2 + $0x8] sm:$0xff]
      %v992 = vld [vmem:[#allocation2 + $0x10] sm:$0xff]
      %v993 = vld [vmem:[#allocation2 + $0x20] sm:$0xff]
      %v994 = vld [vmem:[#allocation2 + $0x28] sm:$0xff]
      %995 = vrot.lane.b32.xlu0 %v848, 17
      %v996 = vpop.permute.xlu0 %995
      %v998 = vmul.f32 %v991, %v996
      %v999 = vmul.f32 %v992, %v996
      %v1000 = vmul.f32 %v993, %v996
      %v1001 = vmul.f32 %v994, %v996
      %1006 = vrot.lane.b32.xlu0 %v998, 111
      %v1007 = vpop.permute.xlu0 %1006
      %1008 = vrot.lane.b32.xlu0 %v999, 111
      %v1009 = vpop.permute.xlu0 %1008
      %1010 = vrot.lane.b32.xlu0 %v1000, 111
      %v1011 = vpop.permute.xlu0 %1010
      %1012 = vrot.lane.b32.xlu0 %v1001, 111
      %v1013 = vpop.permute.xlu0 %1012
      %vm1014 = vcmask 908288
      %v1015 = vsel %vm1014, %v1007, %v1009
      %v1016 = vsel %vm1014, %v1011, %v1013
      %1019 = vst [vmem:[#allocation3 + $0x80] sm:$0xff] %v1015
      %1020 = vst [vmem:[#allocation3 + $0x88] sm:$0xff] %v1016
      %v1021 = vld [vmem:[%s7] sm:$0xff]
      %v1022 = vld [vmem:[%s7 + $0x8] sm:$0xff]
      %v1023 = vld [vmem:[#allocation3] sm:$0xff]
      %v1024 = vld [vmem:[#allocation3 + $0x8] sm:$0xff]
      %v1025 = vld [vmem:[#allocation3 + $0x10] sm:$0xff]
      %v1026 = vld [vmem:[#allocation3 + $0x18] sm:$0xff]
      %v1027 = vld [vmem:[#allocation3 + $0x20] sm:$0xff]
      %v1028 = vld [vmem:[#allocation3 + $0x28] sm:$0xff]
      %v1029 = vld [vmem:[#allocation3 + $0x30] sm:$0xff]
      %v1030 = vld [vmem:[#allocation3 + $0x38] sm:$0xff]
      %v1031 = vld [vmem:[#allocation3 + $0x40] sm:$0xff]
      %v1032 = vld [vmem:[#allocation3 + $0x48] sm:$0xff]
      %v1033 = vld [vmem:[#allocation3 + $0x50] sm:$0xff]
      %v1034 = vld [vmem:[#allocation3 + $0x58] sm:$0xff]
      %v1035 = vld [vmem:[#allocation3 + $0x60] sm:$0xff]
      %v1036 = vld [vmem:[#allocation3 + $0x68] sm:$0xff]
      %v1037 = vld [vmem:[#allocation3 + $0x70] sm:$0xff]
      %v1038 = vld [vmem:[#allocation3 + $0x78] sm:$0xff]
      %v1039 = vld [vmem:[#allocation3 + $0x80] sm:$0xff]
      %v1040 = vld [vmem:[#allocation3 + $0x88] sm:$0xff]
      %v1041 = vld [vmem:[%s8] sm:$0xff]
      %1043 = vset.pattern.permute.xlu0 0
      %1044 = vperm.xlu0 %1043, %v1041
      %v1045 = vpop.permute.xlu0 %1044
      %v1048 = vsel %vm778, %v1022, 0
      %1050 = vmatprep.subr.mxu0 0.0
      %1051 = vmatpush1.msra.mxu0 %v1023
      %1052 = vmatprep.subr.mxu0 0.0
      %1053 = vmatpush1.msra.mxu0 %v1024
      %1054 = vmatprep.subr.mxu0 0.0
      %1055 = vmatpush1.msra.mxu0 %v1025
      %1056 = vmatprep.subr.mxu0 0.0
      %1057 = vmatpush1.msra.mxu0 %v1026
      %1058 = vmatprep.subr.mxu0 0.0
      %1059 = vmatpush1.msra.mxu0 %v1027
      %1060 = vmatprep.subr.mxu0 0.0
      %1061 = vmatpush1.msra.mxu0 %v1028
      %1062 = vmatprep.subr.mxu0 0.0
      %1063 = vmatpush1.msra.mxu0 %v1029
      %1064 = vmatprep.subr.mxu0 0.0
      %1065 = vmatpush1.msra.mxu0 %v1030
      %1066 = vmatprep.subr.mxu0 0.0
      %1067 = vmatpush1.msra.mxu0 %v1031
      %1068 = vmatprep.subr.mxu0 0.0
      %1069 = vmatpush1.msra.mxu0 %v1032
      %1070 = vmatprep.subr.mxu0 0.0
      %1071 = vmatpush1.msra.mxu0 %v1033
      %1072 = vmatprep.subr.mxu0 0.0
      %1073 = vmatpush1.msra.mxu0 %v1034
      %1074 = vmatprep.subr.mxu0 0.0
      %1075 = vmatpush1.msra.mxu0 %v1035
      %1076 = vmatprep.subr.mxu0 0.0
      %1077 = vmatpush1.msra.mxu0 %v1036
      %1078 = vmatprep.subr.mxu0 0.0
      %1079 = vmatpush1.msra.mxu0 %v1037
      %1080 = vmatprep.subr.mxu0 0.0
      %1081 = vmatpush1.msra.mxu0 %v1038
      %1082 = vmatprep.subr.mxu0 0.0
      %1083 = vmatpush1.msra.mxu0 %v1039
      %1084 = vmatprep.subr.mxu0 0.0
      %1085 = vmatpush1.msra.mxu0 %v1040
      %1086 = vmatprep.subr.mxu0 0.0
      %1087 = vmatpush1.msra.mxu0 0.0
      %1088 = vmatprep.subr.mxu0 0.0
      %1089 = vmatpush1.msra.mxu0 0.0
      %1090 = vmatprep.subr.mxu0 0.0
      %1091 = vmatpush1.msra.mxu0 0.0
      %1092 = vmatprep.subr.mxu0 0.0
      %1093 = vmatpush1.msra.mxu0 0.0
      %1094 = vmatprep.subr.mxu0 0.0
      %1095 = vmatpush1.msra.mxu0 0.0
      %1096 = vmatprep.subr.mxu0 0.0
      %1097 = vmatpush1.msra.mxu0 0.0
      %1098 = vmatprep.subr.mxu0 0.0
      %1099 = vmatpush1.msra.mxu0 0.0
      %1100 = vmatprep.subr.mxu0 0.0
      %1101 = vmatpush1.msra.mxu0 0.0
      %1102 = vmatprep.subr.mxu0 0.0
      %1103 = vmatpush1.msra.mxu0 0.0
      %1104 = vmatprep.subr.mxu0 0.0
      %1105 = vmatpush1.msra.mxu0 0.0
      %1106 = vmatprep.subr.mxu0 0.0
      %1107 = vmatpush1.msra.mxu0 0.0
      %1108 = vmatprep.subr.mxu0 0.0
      %1109 = vmatpush1.msra.mxu0 0.0
      %1110 = vmatprep.subr.mxu0 0.0
      %1111 = vmatpush1.msra.mxu0 0.0
      %1112 = vmatprep.subr.mxu0 0.0
      %1113 = vmatpush1.msra.mxu0 0.0
      %1114 = vmatprep.mubr.f32.mxu0 %v1048
      %1115 = vmatmul.mubr.f32.gmra.mrb[0].mxu0 %v1021
      %v1116 = vpop.f32.mrb[0].mxu0
      %v1117 = vadd.f32 %v1045, %v1116
      %v1118 = vpop.f32.mrb[0].mxu0
      %1119 = vdwg.mxu0
      %v1120 = vmax.f32 %v1117, 0.0
      %1121 = vst [vmem:[%s467] sm:$0xff] %v1120
      %p1122 = scmp.lt.s32.totalorder %s24, 1
      %s1123 = scalar_select %p1122, %s24, 1
      %p1124 = scmp.lt.s32.totalorder %s25, 1
      %s1125 = scalar_select %p1124, %s25, 1
      %s1126 = smul.addr %s1123, 2
      %s1127 = sadd.s32 %s1125, %s1126
      %s1128 = smul.addr %s1127, 8
      %s1129 = scalar_lea.vmem %s9, %s1128
      // Predicated region
      $region57: #{double_conv_pallas.1} parent=55 // pred_check
        %p1130 = pneg %p274
      $region58: #{double_conv_pallas.1} parent=55 // pred_check_branch
        %1132 = sbr.rel (%p1130) target = $region60
      $region59: #{double_conv_pallas.1} parent=55 // pred_region
        _
      $region60: #{double_conv_pallas.1} parent=55 // pred_fallthru
        _
    $region56: #{double_conv_pallas.1} parent=5 // pred_fallthru
      _
    %p1133 = scmp.le.s32.totalorder 2, %s15
    // Predicated region
    $region61: #{double_conv_pallas.1} parent=5 // pred_check
      %p1134 = pneg %p1133
    $region62: #{double_conv_pallas.1} parent=5 // pred_check_branch
      %1136 = sbr.rel (%p1134) target = $region64
    $region63: #{double_conv_pallas.1} parent=5 // pred_region
      %s1137 = ssub.s32 %s15, 2
      // Predicated region
      $region65: #{double_conv_pallas.1} parent=63 // pred_check
        %p1138 = pneg %p280
      $region66: #{double_conv_pallas.1} parent=63 // pred_check_branch
        %1140 = sbr.rel (%p1138) target = $region68
      $region67: #{double_conv_pallas.1} parent=63 // pred_region
        %p1141 = scmp.lt.s32.totalorder %s26, 1
        %s1142 = scalar_select %p1141, %s26, 1
        %p1143 = scmp.lt.s32.totalorder %s27, 1
        %s1144 = scalar_select %p1143, %s27, 1
        %s1145 = smul.addr %s1142, 2
        %s1146 = sadd.s32 %s1144, %s1145
        %s1147 = smul.addr %s1146, 8
        %s1148 = scalar_lea.vmem %s9, %s1147
      $region68: #{double_conv_pallas.1} parent=63 // pred_fallthru
        _
    $region64: #{double_conv_pallas.1} parent=5 // pred_fallthru
      _
  $region6: #{double_conv_pallas.1} parent=0 // loop_footer
    %s19 = sadd.s32 1, %s15
  $region7: #{double_conv_pallas.1} parent=0 // loop_footer_branch
    %14 = sbr.rel target = $region3
  $region8: #{double_conv_pallas.1} parent=0 // loop_exit
    _

</llo_original>
